<compile_context>
chip_gen: v7x
topology: tpu7x:2x2x1
jax: 0.10.0
libtpu: 0.0.40
codegen_flags: <defaults>
</compile_context>

<pallas_src>
import functools

import numpy as np
import jax
import jax.numpy as jnp
from jax.experimental import pallas as pl
from jax.experimental.pallas import tpu as pltpu


# ----------------------------------------------------------------------------
# In-kernel helpers (traced inside the Pallas kernel body)
# ----------------------------------------------------------------------------
def _instnorm_lrelu(h):
    # h: (C, S) f32. PyTorch InstanceNorm (biased var, eps=1e-5, affine=False)
    # then LeakyReLU(0.01). Two-pass (centered) variance for robustness.
    m = jnp.mean(h, axis=1, keepdims=True)
    c = h - m
    var = jnp.mean(c * c, axis=1, keepdims=True)
    y = c * jax.lax.rsqrt(var + 1e-5)
    return jnp.maximum(y, 0.01 * y)                      # == LeakyReLU(0.01)


def _conv3x3_accumulate(acc, act_f32, w_taps_ref, mask_ref, width2):
    # acc:        (Cout, S) f32 accumulator
    # act_f32:    (C, S) f32, spatial flattened row-major over (H2, W2) on lanes
    # w_taps_ref: (9, Cout, C) bf16 ref, tap index t = ky*3 + kx
    # mask_ref:   (9, 1, S) f32 ref, per-tap boundary-validity masks
    s = act_f32.shape[1]
    for t in range(9):
        ky, kx = divmod(t, 3)
        dy, dx = ky - 1, kx - 1
        d = dy * width2 + dx                              # flat lane offset
        # rolled[:, s] == act[:, s + d]  (wrap-around killed by the mask)
        a = act_f32 if d == 0 else pltpu.roll(act_f32, (-d) % s, axis=1)
        if not (dy == 0 and dx == 0):
            a = a * mask_ref[t, :, :]                     # zero out-of-bounds taps
        acc = acc + jnp.dot(w_taps_ref[t, :, :], a.astype(jnp.bfloat16),
                            preferred_element_type=jnp.float32)
    return acc


def _fused_kernel(up_ref, skip_ref, w1u_ref, w1s_ref, w2t_ref, mask_ref,
                  out_ref, *, width2):
    b_blk, cout, s = up_ref.shape
    for b in range(b_blk):                                # static, unrolled
        up = up_ref[b, :, :].astype(jnp.float32)          # (Cout, S)
        skip = skip_ref[b, :, :].astype(jnp.float32)      # (Cout, S)

        # conv1 over cat(up, skip) WITHOUT materializing the cat: two weight
        # halves accumulate into the same f32 accumulator.
        acc = jnp.zeros((cout, s), jnp.float32)
        acc = _conv3x3_accumulate(acc, up, w1u_ref, mask_ref, width2)
        acc = _conv3x3_accumulate(acc, skip, w1s_ref, mask_ref, width2)
        h = _instnorm_lrelu(acc)

        acc2 = jnp.zeros((cout, s), jnp.float32)
        acc2 = _conv3x3_accumulate(acc2, h, w2t_ref, mask_ref, width2)
        out_ref[b, :, :] = _instnorm_lrelu(acc2)


# ----------------------------------------------------------------------------
# Host-side helpers (tiny, computed at trace time)
# ----------------------------------------------------------------------------
def _tap_masks(h2, w2):
    # mask[t, 0, s] = 1 iff output position s has a valid in-bounds neighbour
    # for tap t = ky*3+kx (dy=ky-1, dx=kx-1); kills the roll wrap-around.
    s = np.arange(h2 * w2)
    r, c = s // w2, s % w2
    masks = []
    for ky in range(3):
        for kx in range(3):
            dy, dx = ky - 1, kx - 1
            valid = (r + dy >= 0) & (r + dy < h2) & (c + dx >= 0) & (c + dx < w2)
            masks.append(valid.astype(np.float32))
    return jnp.asarray(np.stack(masks)[:, None, :])        # (9, 1, S) f32


def _transposed_conv_2x2(x, wt):
    # ConvTranspose2d(k=2, s=2, bias=False) at LOW resolution (minimal FLOPs):
    # out[n,o,2h+kh,2w+kw] = sum_c x[n,c,h,w] * wt[c,o,kh,kw]
    n, cin, h, w = x.shape
    cout = wt.shape[1]
    y = jnp.einsum("nchw,cokl->nohkwl",
                   x.astype(jnp.bfloat16), wt.astype(jnp.bfloat16),
                   preferred_element_type=jnp.float32)
    return y.reshape(n, cout, 2 * h, 2 * w)


def _vmem_budget_bytes(b_blk, cout, s, const_bytes):
    try:  # generation-aware cap when the query is available
        cap = int(pltpu.get_tpu_info().vmem_capacity_bytes * 0.85)
    except Exception:  # pragma: no cover - conservative fallback (v7x-safe)
        cap = 56 * 1024 * 1024
    slab_bf16 = b_blk * cout * s * 2
    slab_f32 = b_blk * cout * s * 4
    est = (2 * 2 * slab_bf16          # up + skip, double-buffered
           + 2 * slab_f32             # out, double-buffered
           + 2 * const_bytes          # weights + masks
           + 10 * slab_f32            # in-kernel working-set headroom
           + (2 << 20))
    return max(32 * 1024 * 1024, min(est, cap))


# ----------------------------------------------------------------------------
# UNesTBlock forward
# ----------------------------------------------------------------------------
def unest_block_forward(inp_nchw, skip_nchw, params, *, samples_per_step=None):
    n, cin, h, w = inp_nchw.shape
    cout = params["transp_w"].shape[1]
    h2, w2 = 2 * h, 2 * w
    s = h2 * w2
    assert skip_nchw.shape == (n, cout, h2, w2)

    # ---- Transposed conv (XLA, tiny) -> bf16 HBM-facing slabs for the kernel.
    up = _transposed_conv_2x2(inp_nchw, params["transp_w"])
    up = up.reshape(n, cout, s).astype(jnp.bfloat16)
    skip = skip_nchw.reshape(n, cout, s).astype(jnp.bfloat16)

    # ---- Per-tap weight re-layouts (tiny, one-time); conv1 split up/skip halves.
    w1_taps = jnp.transpose(params["conv1_w"], (2, 3, 0, 1)).reshape(
        9, cout, 2 * cout)
    w1u = w1_taps[:, :, :cout].astype(jnp.bfloat16)        # (9, Cout, Cout)
    w1s = w1_taps[:, :, cout:].astype(jnp.bfloat16)        # (9, Cout, Cout)
    w2t = jnp.transpose(params["conv2_w"], (2, 3, 0, 1)).reshape(
        9, cout, cout).astype(jnp.bfloat16)                # (9, Cout, Cout)

    masks = _tap_masks(h2, w2)                              # (9, 1, S) f32

    # ---- Samples per grid step: amortize per-step overhead on v5e/v6e while
    # keeping >= 2 grid steps so v7x's two TensorCores both get work.
    if samples_per_step is None:
        samples_per_step = 2 if (n % 2 == 0 and n >= 4) else 1
    b_blk = samples_per_step
    assert n % b_blk == 0

    const_bytes = (w1u.size + w1s.size + w2t.size) * 2 + masks.size * 4
    vmem_limit = _vmem_budget_bytes(b_blk, cout, s, const_bytes)

    kernel = functools.partial(_fused_kernel, width2=w2)

    out = pl.pallas_call(
        kernel,
        out_shape=jax.ShapeDtypeStruct((n, cout, s), jnp.float32),
        grid=(n // b_blk,),
        in_specs=[
            pl.BlockSpec((b_blk, cout, s), lambda i: (i, 0, 0)),
            pl.BlockSpec((b_blk, cout, s), lambda i: (i, 0, 0)),
            pl.BlockSpec((9, cout, cout), lambda i: (0, 0, 0)),
            pl.BlockSpec((9, cout, cout), lambda i: (0, 0, 0)),
            pl.BlockSpec((9, cout, cout), lambda i: (0, 0, 0)),
            pl.BlockSpec((9, 1, s), lambda i: (0, 0, 0)),
        ],
        out_specs=pl.BlockSpec((b_blk, cout, s), lambda i: (i, 0, 0)),
        compiler_params=pltpu.CompilerParams(
            dimension_semantics=("parallel",),
            vmem_limit_bytes=int(vmem_limit),
        ),
    )(up, skip, w1u, w1s, w2t, masks)

    return out.reshape(n, cout, h2, w2)


def init_params(key, in_channels, out_channels):
    k1, k2, k3 = jax.random.split(key, 3)
    return {
        # ConvTranspose2d(in_channels, out_channels, k=2, s=2, bias=False)
        "transp_w": 0.1 * jax.random.normal(
            k1, (in_channels, out_channels, 2, 2), jnp.float32),
        # Conv2d(2*out_channels, out_channels, k=3, s=1, p=1, bias=False)
        "conv1_w": 0.1 * jax.random.normal(
            k2, (out_channels, 2 * out_channels, 3, 3), jnp.float32),
        # Conv2d(out_channels, out_channels, k=3, s=1, p=1, bias=False)
        "conv2_w": 0.1 * jax.random.normal(
            k3, (out_channels, out_channels, 3, 3), jnp.float32),
    }


# ----------------------------------------------------------------------------
# Pure-JAX f32 reference (same math as the previously validated implementation)
# ----------------------------------------------------------------------------
def _reference_forward(inp_nchw, skip_nchw, params):
    x = jnp.transpose(inp_nchw, (0, 2, 3, 1)).astype(jnp.float32)
    sk = jnp.transpose(skip_nchw, (0, 2, 3, 1)).astype(jnp.float32)
    n, h, w, cin = x.shape
    cout = params["transp_w"].shape[1]

    w_t = params["transp_w"]
    w_mat = jnp.transpose(w_t, (0, 2, 3, 1)).reshape(cin, 4 * cout)
    y = (x.reshape(n * h * w, cin) @ w_mat).reshape(n, h, w, 2, 2, cout)
    up = jnp.transpose(y, (0, 1, 3, 2, 4, 5)).reshape(n, 2 * h, 2 * w, cout)
    cat = jnp.concatenate([up, sk], axis=-1)

    def conv3(xh, wc):
        co, ci = wc.shape[0], wc.shape[1]
        nn, hh, ww, _ = xh.shape
        xp = jnp.pad(xh, ((0, 0), (1, 1), (1, 1), (0, 0)))
        pats = jnp.concatenate(
            [xp[:, a:a + hh, b:b + ww, :] for a in range(3) for b in range(3)],
            axis=-1)
        wm = jnp.transpose(wc, (2, 3, 1, 0)).reshape(9 * ci, co)
        return (pats.reshape(nn * hh * ww, 9 * ci) @ wm).reshape(nn, hh, ww, co)

    def inorm_lrelu(xh):
        m = jnp.mean(xh, axis=(1, 2), keepdims=True)
        v = jnp.mean((xh - m) ** 2, axis=(1, 2), keepdims=True)
        yh = (xh - m) * jax.lax.rsqrt(v + 1e-5)
        return jnp.where(yh >= 0, yh, 0.01 * yh)

    hcur = inorm_lrelu(conv3(cat, params["conv1_w"]))
    hcur = inorm_lrelu(conv3(hcur, params["conv2_w"]))
    return jnp.transpose(hcur, (0, 3, 1, 2))


if __name__ == "__main__":
    N, C_IN, C_OUT, H, W = 2, 16, 8, 8, 8

    key = jax.random.PRNGKey(0)
    k_param, k_inp, k_skip = jax.random.split(key, 3)

    params = init_params(k_param, C_IN, C_OUT)
    inp = jax.random.normal(k_inp, (N, C_IN, H, W), jnp.float32)             # NCHW
    skip = jax.random.normal(k_skip, (N, C_OUT, 2 * H, 2 * W), jnp.float32)  # NCHW

    out = jax.jit(unest_block_forward)(inp, skip, params)
    out = jax.block_until_ready(out)

    assert out.shape == (N, C_OUT, 2 * H, 2 * W), out.shape
    assert bool(jnp.all(jnp.isfinite(out)))

    # Correctness vs f32 reference (bf16 MXU operands -> relaxed tolerance).
    ref = _reference_forward(inp, skip, params)
    rel_err = float(jnp.linalg.norm(out - ref) / jnp.linalg.norm(ref))
    assert rel_err < 3e-2, rel_err

    print("KERNEL_OK")
</pallas_src>

<mosaic_0001>
module attributes {stable_mosaic.version = 11 : i64} {
  func.func @_fused_kernel(%arg0: i32, %arg1: memref<1x8x256xbf16, #tpu.memory_space<vmem>>, %arg2: memref<1x8x256xbf16, #tpu.memory_space<vmem>>, %arg3: memref<9x8x8xbf16, #tpu.memory_space<vmem>>, %arg4: memref<9x8x8xbf16, #tpu.memory_space<vmem>>, %arg5: memref<9x8x8xbf16, #tpu.memory_space<vmem>>, %arg6: memref<9x1x256xf32, #tpu.memory_space<vmem>>, %arg7: memref<1x8x256xf32, #tpu.memory_space<vmem>>) attributes {dimension_semantics = [#tpu.dimension_semantics<parallel>], iteration_bounds = array<i64: 2>, scalar_prefetch = 0 : i64, scratch_operands = 0 : i64, tpu.core_type = #tpu.core_type<tc>, window_params = [{transform_indices = @transform_0, window_bounds = array<i64: 1, 8, 256>}, {transform_indices = @transform_1, window_bounds = array<i64: 1, 8, 256>}, {pipeline_mode = #tpu.pipeline_mode<synchronous>, transform_indices = @transform_2, window_bounds = array<i64: 9, 8, 8>}, {pipeline_mode = #tpu.pipeline_mode<synchronous>, transform_indices = @transform_3, window_bounds = array<i64: 9, 8, 8>}, {pipeline_mode = #tpu.pipeline_mode<synchronous>, transform_indices = @transform_4, window_bounds = array<i64: 9, 8, 8>}, {pipeline_mode = #tpu.pipeline_mode<synchronous>, transform_indices = @transform_5, window_bounds = array<i64: 9, 1, 256>}, {transform_indices = @transform_6, window_bounds = array<i64: 1, 8, 256>}]} {
    %c0 = arith.constant 0 : index
    %c0_0 = arith.constant 0 : index
    %c0_1 = arith.constant 0 : index
    %0 = vector.load %arg1[%c0, %c0_0, %c0_1] : memref<1x8x256xbf16, #tpu.memory_space<vmem>>, vector<1x8x256xbf16>
    %1 = vector.shape_cast %0 : vector<1x8x256xbf16> to vector<8x256xbf16>
    %2 = arith.extf %1 : vector<8x256xbf16> to vector<8x256xf32>
    %c0_2 = arith.constant 0 : index
    %c0_3 = arith.constant 0 : index
    %c0_4 = arith.constant 0 : index
    %3 = vector.load %arg2[%c0_2, %c0_3, %c0_4] : memref<1x8x256xbf16, #tpu.memory_space<vmem>>, vector<1x8x256xbf16>
    %4 = vector.shape_cast %3 : vector<1x8x256xbf16> to vector<8x256xbf16>
    %5 = arith.extf %4 : vector<8x256xbf16> to vector<8x256xf32>
    %cst = arith.constant 0.000000e+00 : f32
    %6 = vector.broadcast %cst : f32 to vector<8x256xf32>
    %c17_i32 = arith.constant 17 : i32
    %7 = tpu.dynamic_rotate %2 by %c17_i32 dim 1 : vector<8x256xf32>, i32 -> vector<8x256xf32>
    %c0_5 = arith.constant 0 : index
    %c0_6 = arith.constant 0 : index
    %c0_7 = arith.constant 0 : index
    %8 = vector.load %arg6[%c0_5, %c0_6, %c0_7] : memref<9x1x256xf32, #tpu.memory_space<vmem>>, vector<1x1x256xf32>
    %9 = vector.shape_cast %8 : vector<1x1x256xf32> to vector<1x256xf32>
    %10 = vector.broadcast %9 : vector<1x256xf32> to vector<8x256xf32>
    %11 = arith.mulf %7, %10 : vector<8x256xf32>
    %c0_8 = arith.constant 0 : index
    %c0_9 = arith.constant 0 : index
    %c0_10 = arith.constant 0 : index
    %12 = vector.load %arg3[%c0_8, %c0_9, %c0_10] : memref<9x8x8xbf16, #tpu.memory_space<vmem>>, vector<1x8x8xbf16>
    %13 = vector.shape_cast %12 : vector<1x8x8xbf16> to vector<8x8xbf16>
    %14 = arith.truncf %11 : vector<8x256xf32> to vector<8x256xbf16>
    %cst_11 = arith.constant dense<0.000000e+00> : vector<8x256xf32>
    %15 = tpu.matmul %13, %14, %cst_11 {dimension_numbers = #tpu.dot_dimension_numbers<[1], [0], [0], [1], [0, 0, 1, 1], [], []>} : vector<8x8xbf16>, vector<8x256xbf16>, vector<8x256xf32> -> vector<8x256xf32>
    %16 = arith.addf %6, %15 : vector<8x256xf32>
    %c16_i32 = arith.constant 16 : i32
    %17 = tpu.dynamic_rotate %2 by %c16_i32 dim 1 : vector<8x256xf32>, i32 -> vector<8x256xf32>
    %c1 = arith.constant 1 : index
    %c0_12 = arith.constant 0 : index
    %c0_13 = arith.constant 0 : index
    %18 = vector.load %arg6[%c1, %c0_12, %c0_13] : memref<9x1x256xf32, #tpu.memory_space<vmem>>, vector<1x1x256xf32>
    %19 = vector.shape_cast %18 : vector<1x1x256xf32> to vector<1x256xf32>
    %20 = vector.broadcast %19 : vector<1x256xf32> to vector<8x256xf32>
    %21 = arith.mulf %17, %20 : vector<8x256xf32>
    %c1_14 = arith.constant 1 : index
    %c0_15 = arith.constant 0 : index
    %c0_16 = arith.constant 0 : index
    %22 = vector.load %arg3[%c1_14, %c0_15, %c0_16] : memref<9x8x8xbf16, #tpu.memory_space<vmem>>, vector<1x8x8xbf16>
    %23 = vector.shape_cast %22 : vector<1x8x8xbf16> to vector<8x8xbf16>
    %24 = arith.truncf %21 : vector<8x256xf32> to vector<8x256xbf16>
    %cst_17 = arith.constant dense<0.000000e+00> : vector<8x256xf32>
    %25 = tpu.matmul %23, %24, %cst_17 {dimension_numbers = #tpu.dot_dimension_numbers<[1], [0], [0], [1], [0, 0, 1, 1], [], []>} : vector<8x8xbf16>, vector<8x256xbf16>, vector<8x256xf32> -> vector<8x256xf32>
    %26 = arith.addf %16, %25 : vector<8x256xf32>
    %c15_i32 = arith.constant 15 : i32
    %27 = tpu.dynamic_rotate %2 by %c15_i32 dim 1 : vector<8x256xf32>, i32 -> vector<8x256xf32>
    %c2 = arith.constant 2 : index
    %c0_18 = arith.constant 0 : index
    %c0_19 = arith.constant 0 : index
    %28 = vector.load %arg6[%c2, %c0_18, %c0_19] : memref<9x1x256xf32, #tpu.memory_space<vmem>>, vector<1x1x256xf32>
    %29 = vector.shape_cast %28 : vector<1x1x256xf32> to vector<1x256xf32>
    %30 = vector.broadcast %29 : vector<1x256xf32> to vector<8x256xf32>
    %31 = arith.mulf %27, %30 : vector<8x256xf32>
    %c2_20 = arith.constant 2 : index
    %c0_21 = arith.constant 0 : index
    %c0_22 = arith.constant 0 : index
    %32 = vector.load %arg3[%c2_20, %c0_21, %c0_22] : memref<9x8x8xbf16, #tpu.memory_space<vmem>>, vector<1x8x8xbf16>
    %33 = vector.shape_cast %32 : vector<1x8x8xbf16> to vector<8x8xbf16>
    %34 = arith.truncf %31 : vector<8x256xf32> to vector<8x256xbf16>
    %cst_23 = arith.constant dense<0.000000e+00> : vector<8x256xf32>
    %35 = tpu.matmul %33, %34, %cst_23 {dimension_numbers = #tpu.dot_dimension_numbers<[1], [0], [0], [1], [0, 0, 1, 1], [], []>} : vector<8x8xbf16>, vector<8x256xbf16>, vector<8x256xf32> -> vector<8x256xf32>
    %36 = arith.addf %26, %35 : vector<8x256xf32>
    %c1_i32 = arith.constant 1 : i32
    %37 = tpu.dynamic_rotate %2 by %c1_i32 dim 1 : vector<8x256xf32>, i32 -> vector<8x256xf32>
    %c3 = arith.constant 3 : index
    %c0_24 = arith.constant 0 : index
    %c0_25 = arith.constant 0 : index
    %38 = vector.load %arg6[%c3, %c0_24, %c0_25] : memref<9x1x256xf32, #tpu.memory_space<vmem>>, vector<1x1x256xf32>
    %39 = vector.shape_cast %38 : vector<1x1x256xf32> to vector<1x256xf32>
    %40 = vector.broadcast %39 : vector<1x256xf32> to vector<8x256xf32>
    %41 = arith.mulf %37, %40 : vector<8x256xf32>
    %c3_26 = arith.constant 3 : index
    %c0_27 = arith.constant 0 : index
    %c0_28 = arith.constant 0 : index
    %42 = vector.load %arg3[%c3_26, %c0_27, %c0_28] : memref<9x8x8xbf16, #tpu.memory_space<vmem>>, vector<1x8x8xbf16>
    %43 = vector.shape_cast %42 : vector<1x8x8xbf16> to vector<8x8xbf16>
    %44 = arith.truncf %41 : vector<8x256xf32> to vector<8x256xbf16>
    %cst_29 = arith.constant dense<0.000000e+00> : vector<8x256xf32>
    %45 = tpu.matmul %43, %44, %cst_29 {dimension_numbers = #tpu.dot_dimension_numbers<[1], [0], [0], [1], [0, 0, 1, 1], [], []>} : vector<8x8xbf16>, vector<8x256xbf16>, vector<8x256xf32> -> vector<8x256xf32>
    %46 = arith.addf %36, %45 : vector<8x256xf32>
    %c4 = arith.constant 4 : index
    %c0_30 = arith.constant 0 : index
    %c0_31 = arith.constant 0 : index
    %47 = vector.load %arg3[%c4, %c0_30, %c0_31] : memref<9x8x8xbf16, #tpu.memory_space<vmem>>, vector<1x8x8xbf16>
    %48 = vector.shape_cast %47 : vector<1x8x8xbf16> to vector<8x8xbf16>
    %49 = arith.truncf %2 : vector<8x256xf32> to vector<8x256xbf16>
    %cst_32 = arith.constant dense<0.000000e+00> : vector<8x256xf32>
    %50 = tpu.matmul %48, %49, %cst_32 {dimension_numbers = #tpu.dot_dimension_numbers<[1], [0], [0], [1], [0, 0, 1, 1], [], []>} : vector<8x8xbf16>, vector<8x256xbf16>, vector<8x256xf32> -> vector<8x256xf32>
    %51 = arith.addf %46, %50 : vector<8x256xf32>
    %c255_i32 = arith.constant 255 : i32
    %52 = tpu.dynamic_rotate %2 by %c255_i32 dim 1 : vector<8x256xf32>, i32 -> vector<8x256xf32>
    %c5 = arith.constant 5 : index
    %c0_33 = arith.constant 0 : index
    %c0_34 = arith.constant 0 : index
    %53 = vector.load %arg6[%c5, %c0_33, %c0_34] : memref<9x1x256xf32, #tpu.memory_space<vmem>>, vector<1x1x256xf32>
    %54 = vector.shape_cast %53 : vector<1x1x256xf32> to vector<1x256xf32>
    %55 = vector.broadcast %54 : vector<1x256xf32> to vector<8x256xf32>
    %56 = arith.mulf %52, %55 : vector<8x256xf32>
    %c5_35 = arith.constant 5 : index
    %c0_36 = arith.constant 0 : index
    %c0_37 = arith.constant 0 : index
    %57 = vector.load %arg3[%c5_35, %c0_36, %c0_37] : memref<9x8x8xbf16, #tpu.memory_space<vmem>>, vector<1x8x8xbf16>
    %58 = vector.shape_cast %57 : vector<1x8x8xbf16> to vector<8x8xbf16>
    %59 = arith.truncf %56 : vector<8x256xf32> to vector<8x256xbf16>
    %cst_38 = arith.constant dense<0.000000e+00> : vector<8x256xf32>
    %60 = tpu.matmul %58, %59, %cst_38 {dimension_numbers = #tpu.dot_dimension_numbers<[1], [0], [0], [1], [0, 0, 1, 1], [], []>} : vector<8x8xbf16>, vector<8x256xbf16>, vector<8x256xf32> -> vector<8x256xf32>
    %61 = arith.addf %51, %60 : vector<8x256xf32>
    %c241_i32 = arith.constant 241 : i32
    %62 = tpu.dynamic_rotate %2 by %c241_i32 dim 1 : vector<8x256xf32>, i32 -> vector<8x256xf32>
    %c6 = arith.constant 6 : index
    %c0_39 = arith.constant 0 : index
    %c0_40 = arith.constant 0 : index
    %63 = vector.load %arg6[%c6, %c0_39, %c0_40] : memref<9x1x256xf32, #tpu.memory_space<vmem>>, vector<1x1x256xf32>
    %64 = vector.shape_cast %63 : vector<1x1x256xf32> to vector<1x256xf32>
    %65 = vector.broadcast %64 : vector<1x256xf32> to vector<8x256xf32>
    %66 = arith.mulf %62, %65 : vector<8x256xf32>
    %c6_41 = arith.constant 6 : index
    %c0_42 = arith.constant 0 : index
    %c0_43 = arith.constant 0 : index
    %67 = vector.load %arg3[%c6_41, %c0_42, %c0_43] : memref<9x8x8xbf16, #tpu.memory_space<vmem>>, vector<1x8x8xbf16>
    %68 = vector.shape_cast %67 : vector<1x8x8xbf16> to vector<8x8xbf16>
    %69 = arith.truncf %66 : vector<8x256xf32> to vector<8x256xbf16>
    %cst_44 = arith.constant dense<0.000000e+00> : vector<8x256xf32>
    %70 = tpu.matmul %68, %69, %cst_44 {dimension_numbers = #tpu.dot_dimension_numbers<[1], [0], [0], [1], [0, 0, 1, 1], [], []>} : vector<8x8xbf16>, vector<8x256xbf16>, vector<8x256xf32> -> vector<8x256xf32>
    %71 = arith.addf %61, %70 : vector<8x256xf32>
    %c240_i32 = arith.constant 240 : i32
    %72 = tpu.dynamic_rotate %2 by %c240_i32 dim 1 : vector<8x256xf32>, i32 -> vector<8x256xf32>
    %c7 = arith.constant 7 : index
    %c0_45 = arith.constant 0 : index
    %c0_46 = arith.constant 0 : index
    %73 = vector.load %arg6[%c7, %c0_45, %c0_46] : memref<9x1x256xf32, #tpu.memory_space<vmem>>, vector<1x1x256xf32>
    %74 = vector.shape_cast %73 : vector<1x1x256xf32> to vector<1x256xf32>
    %75 = vector.broadcast %74 : vector<1x256xf32> to vector<8x256xf32>
    %76 = arith.mulf %72, %75 : vector<8x256xf32>
    %c7_47 = arith.constant 7 : index
    %c0_48 = arith.constant 0 : index
    %c0_49 = arith.constant 0 : index
    %77 = vector.load %arg3[%c7_47, %c0_48, %c0_49] : memref<9x8x8xbf16, #tpu.memory_space<vmem>>, vector<1x8x8xbf16>
    %78 = vector.shape_cast %77 : vector<1x8x8xbf16> to vector<8x8xbf16>
    %79 = arith.truncf %76 : vector<8x256xf32> to vector<8x256xbf16>
    %cst_50 = arith.constant dense<0.000000e+00> : vector<8x256xf32>
    %80 = tpu.matmul %78, %79, %cst_50 {dimension_numbers = #tpu.dot_dimension_numbers<[1], [0], [0], [1], [0, 0, 1, 1], [], []>} : vector<8x8xbf16>, vector<8x256xbf16>, vector<8x256xf32> -> vector<8x256xf32>
    %81 = arith.addf %71, %80 : vector<8x256xf32>
    %c239_i32 = arith.constant 239 : i32
    %82 = tpu.dynamic_rotate %2 by %c239_i32 dim 1 : vector<8x256xf32>, i32 -> vector<8x256xf32>
    %c8 = arith.constant 8 : index
    %c0_51 = arith.constant 0 : index
    %c0_52 = arith.constant 0 : index
    %83 = vector.load %arg6[%c8, %c0_51, %c0_52] : memref<9x1x256xf32, #tpu.memory_space<vmem>>, vector<1x1x256xf32>
    %84 = vector.shape_cast %83 : vector<1x1x256xf32> to vector<1x256xf32>
    %85 = vector.broadcast %84 : vector<1x256xf32> to vector<8x256xf32>
    %86 = arith.mulf %82, %85 : vector<8x256xf32>
    %c8_53 = arith.constant 8 : index
    %c0_54 = arith.constant 0 : index
    %c0_55 = arith.constant 0 : index
    %87 = vector.load %arg3[%c8_53, %c0_54, %c0_55] : memref<9x8x8xbf16, #tpu.memory_space<vmem>>, vector<1x8x8xbf16>
    %88 = vector.shape_cast %87 : vector<1x8x8xbf16> to vector<8x8xbf16>
    %89 = arith.truncf %86 : vector<8x256xf32> to vector<8x256xbf16>
    %cst_56 = arith.constant dense<0.000000e+00> : vector<8x256xf32>
    %90 = tpu.matmul %88, %89, %cst_56 {dimension_numbers = #tpu.dot_dimension_numbers<[1], [0], [0], [1], [0, 0, 1, 1], [], []>} : vector<8x8xbf16>, vector<8x256xbf16>, vector<8x256xf32> -> vector<8x256xf32>
    %91 = arith.addf %81, %90 : vector<8x256xf32>
    %c17_i32_57 = arith.constant 17 : i32
    %92 = tpu.dynamic_rotate %5 by %c17_i32_57 dim 1 : vector<8x256xf32>, i32 -> vector<8x256xf32>
    %c0_58 = arith.constant 0 : index
    %c0_59 = arith.constant 0 : index
    %c0_60 = arith.constant 0 : index
    %93 = vector.load %arg6[%c0_58, %c0_59, %c0_60] : memref<9x1x256xf32, #tpu.memory_space<vmem>>, vector<1x1x256xf32>
    %94 = vector.shape_cast %93 : vector<1x1x256xf32> to vector<1x256xf32>
    %95 = vector.broadcast %94 : vector<1x256xf32> to vector<8x256xf32>
    %96 = arith.mulf %92, %95 : vector<8x256xf32>
    %c0_61 = arith.constant 0 : index
    %c0_62 = arith.constant 0 : index
    %c0_63 = arith.constant 0 : index
    %97 = vector.load %arg4[%c0_61, %c0_62, %c0_63] : memref<9x8x8xbf16, #tpu.memory_space<vmem>>, vector<1x8x8xbf16>
    %98 = vector.shape_cast %97 : vector<1x8x8xbf16> to vector<8x8xbf16>
    %99 = arith.truncf %96 : vector<8x256xf32> to vector<8x256xbf16>
    %cst_64 = arith.constant dense<0.000000e+00> : vector<8x256xf32>
    %100 = tpu.matmul %98, %99, %cst_64 {dimension_numbers = #tpu.dot_dimension_numbers<[1], [0], [0], [1], [0, 0, 1, 1], [], []>} : vector<8x8xbf16>, vector<8x256xbf16>, vector<8x256xf32> -> vector<8x256xf32>
    %101 = arith.addf %91, %100 : vector<8x256xf32>
    %c16_i32_65 = arith.constant 16 : i32
    %102 = tpu.dynamic_rotate %5 by %c16_i32_65 dim 1 : vector<8x256xf32>, i32 -> vector<8x256xf32>
    %c1_66 = arith.constant 1 : index
    %c0_67 = arith.constant 0 : index
    %c0_68 = arith.constant 0 : index
    %103 = vector.load %arg6[%c1_66, %c0_67, %c0_68] : memref<9x1x256xf32, #tpu.memory_space<vmem>>, vector<1x1x256xf32>
    %104 = vector.shape_cast %103 : vector<1x1x256xf32> to vector<1x256xf32>
    %105 = vector.broadcast %104 : vector<1x256xf32> to vector<8x256xf32>
    %106 = arith.mulf %102, %105 : vector<8x256xf32>
    %c1_69 = arith.constant 1 : index
    %c0_70 = arith.constant 0 : index
    %c0_71 = arith.constant 0 : index
    %107 = vector.load %arg4[%c1_69, %c0_70, %c0_71] : memref<9x8x8xbf16, #tpu.memory_space<vmem>>, vector<1x8x8xbf16>
    %108 = vector.shape_cast %107 : vector<1x8x8xbf16> to vector<8x8xbf16>
    %109 = arith.truncf %106 : vector<8x256xf32> to vector<8x256xbf16>
    %cst_72 = arith.constant dense<0.000000e+00> : vector<8x256xf32>
    %110 = tpu.matmul %108, %109, %cst_72 {dimension_numbers = #tpu.dot_dimension_numbers<[1], [0], [0], [1], [0, 0, 1, 1], [], []>} : vector<8x8xbf16>, vector<8x256xbf16>, vector<8x256xf32> -> vector<8x256xf32>
    %111 = arith.addf %101, %110 : vector<8x256xf32>
    %c15_i32_73 = arith.constant 15 : i32
    %112 = tpu.dynamic_rotate %5 by %c15_i32_73 dim 1 : vector<8x256xf32>, i32 -> vector<8x256xf32>
    %c2_74 = arith.constant 2 : index
    %c0_75 = arith.constant 0 : index
    %c0_76 = arith.constant 0 : index
    %113 = vector.load %arg6[%c2_74, %c0_75, %c0_76] : memref<9x1x256xf32, #tpu.memory_space<vmem>>, vector<1x1x256xf32>
    %114 = vector.shape_cast %113 : vector<1x1x256xf32> to vector<1x256xf32>
    %115 = vector.broadcast %114 : vector<1x256xf32> to vector<8x256xf32>
    %116 = arith.mulf %112, %115 : vector<8x256xf32>
    %c2_77 = arith.constant 2 : index
    %c0_78 = arith.constant 0 : index
    %c0_79 = arith.constant 0 : index
    %117 = vector.load %arg4[%c2_77, %c0_78, %c0_79] : memref<9x8x8xbf16, #tpu.memory_space<vmem>>, vector<1x8x8xbf16>
    %118 = vector.shape_cast %117 : vector<1x8x8xbf16> to vector<8x8xbf16>
    %119 = arith.truncf %116 : vector<8x256xf32> to vector<8x256xbf16>
    %cst_80 = arith.constant dense<0.000000e+00> : vector<8x256xf32>
    %120 = tpu.matmul %118, %119, %cst_80 {dimension_numbers = #tpu.dot_dimension_numbers<[1], [0], [0], [1], [0, 0, 1, 1], [], []>} : vector<8x8xbf16>, vector<8x256xbf16>, vector<8x256xf32> -> vector<8x256xf32>
    %121 = arith.addf %111, %120 : vector<8x256xf32>
    %c1_i32_81 = arith.constant 1 : i32
    %122 = tpu.dynamic_rotate %5 by %c1_i32_81 dim 1 : vector<8x256xf32>, i32 -> vector<8x256xf32>
    %c3_82 = arith.constant 3 : index
    %c0_83 = arith.constant 0 : index
    %c0_84 = arith.constant 0 : index
    %123 = vector.load %arg6[%c3_82, %c0_83, %c0_84] : memref<9x1x256xf32, #tpu.memory_space<vmem>>, vector<1x1x256xf32>
    %124 = vector.shape_cast %123 : vector<1x1x256xf32> to vector<1x256xf32>
    %125 = vector.broadcast %124 : vector<1x256xf32> to vector<8x256xf32>
    %126 = arith.mulf %122, %125 : vector<8x256xf32>
    %c3_85 = arith.constant 3 : index
    %c0_86 = arith.constant 0 : index
    %c0_87 = arith.constant 0 : index
    %127 = vector.load %arg4[%c3_85, %c0_86, %c0_87] : memref<9x8x8xbf16, #tpu.memory_space<vmem>>, vector<1x8x8xbf16>
    %128 = vector.shape_cast %127 : vector<1x8x8xbf16> to vector<8x8xbf16>
    %129 = arith.truncf %126 : vector<8x256xf32> to vector<8x256xbf16>
    %cst_88 = arith.constant dense<0.000000e+00> : vector<8x256xf32>
    %130 = tpu.matmul %128, %129, %cst_88 {dimension_numbers = #tpu.dot_dimension_numbers<[1], [0], [0], [1], [0, 0, 1, 1], [], []>} : vector<8x8xbf16>, vector<8x256xbf16>, vector<8x256xf32> -> vector<8x256xf32>
    %131 = arith.addf %121, %130 : vector<8x256xf32>
    %c4_89 = arith.constant 4 : index
    %c0_90 = arith.constant 0 : index
    %c0_91 = arith.constant 0 : index
    %132 = vector.load %arg4[%c4_89, %c0_90, %c0_91] : memref<9x8x8xbf16, #tpu.memory_space<vmem>>, vector<1x8x8xbf16>
    %133 = vector.shape_cast %132 : vector<1x8x8xbf16> to vector<8x8xbf16>
    %134 = arith.truncf %5 : vector<8x256xf32> to vector<8x256xbf16>
    %cst_92 = arith.constant dense<0.000000e+00> : vector<8x256xf32>
    %135 = tpu.matmul %133, %134, %cst_92 {dimension_numbers = #tpu.dot_dimension_numbers<[1], [0], [0], [1], [0, 0, 1, 1], [], []>} : vector<8x8xbf16>, vector<8x256xbf16>, vector<8x256xf32> -> vector<8x256xf32>
    %136 = arith.addf %131, %135 : vector<8x256xf32>
    %c255_i32_93 = arith.constant 255 : i32
    %137 = tpu.dynamic_rotate %5 by %c255_i32_93 dim 1 : vector<8x256xf32>, i32 -> vector<8x256xf32>
    %c5_94 = arith.constant 5 : index
    %c0_95 = arith.constant 0 : index
    %c0_96 = arith.constant 0 : index
    %138 = vector.load %arg6[%c5_94, %c0_95, %c0_96] : memref<9x1x256xf32, #tpu.memory_space<vmem>>, vector<1x1x256xf32>
    %139 = vector.shape_cast %138 : vector<1x1x256xf32> to vector<1x256xf32>
    %140 = vector.broadcast %139 : vector<1x256xf32> to vector<8x256xf32>
    %141 = arith.mulf %137, %140 : vector<8x256xf32>
    %c5_97 = arith.constant 5 : index
    %c0_98 = arith.constant 0 : index
    %c0_99 = arith.constant 0 : index
    %142 = vector.load %arg4[%c5_97, %c0_98, %c0_99] : memref<9x8x8xbf16, #tpu.memory_space<vmem>>, vector<1x8x8xbf16>
    %143 = vector.shape_cast %142 : vector<1x8x8xbf16> to vector<8x8xbf16>
    %144 = arith.truncf %141 : vector<8x256xf32> to vector<8x256xbf16>
    %cst_100 = arith.constant dense<0.000000e+00> : vector<8x256xf32>
    %145 = tpu.matmul %143, %144, %cst_100 {dimension_numbers = #tpu.dot_dimension_numbers<[1], [0], [0], [1], [0, 0, 1, 1], [], []>} : vector<8x8xbf16>, vector<8x256xbf16>, vector<8x256xf32> -> vector<8x256xf32>
    %146 = arith.addf %136, %145 : vector<8x256xf32>
    %c241_i32_101 = arith.constant 241 : i32
    %147 = tpu.dynamic_rotate %5 by %c241_i32_101 dim 1 : vector<8x256xf32>, i32 -> vector<8x256xf32>
    %c6_102 = arith.constant 6 : index
    %c0_103 = arith.constant 0 : index
    %c0_104 = arith.constant 0 : index
    %148 = vector.load %arg6[%c6_102, %c0_103, %c0_104] : memref<9x1x256xf32, #tpu.memory_space<vmem>>, vector<1x1x256xf32>
    %149 = vector.shape_cast %148 : vector<1x1x256xf32> to vector<1x256xf32>
    %150 = vector.broadcast %149 : vector<1x256xf32> to vector<8x256xf32>
    %151 = arith.mulf %147, %150 : vector<8x256xf32>
    %c6_105 = arith.constant 6 : index
    %c0_106 = arith.constant 0 : index
    %c0_107 = arith.constant 0 : index
    %152 = vector.load %arg4[%c6_105, %c0_106, %c0_107] : memref<9x8x8xbf16, #tpu.memory_space<vmem>>, vector<1x8x8xbf16>
    %153 = vector.shape_cast %152 : vector<1x8x8xbf16> to vector<8x8xbf16>
    %154 = arith.truncf %151 : vector<8x256xf32> to vector<8x256xbf16>
    %cst_108 = arith.constant dense<0.000000e+00> : vector<8x256xf32>
    %155 = tpu.matmul %153, %154, %cst_108 {dimension_numbers = #tpu.dot_dimension_numbers<[1], [0], [0], [1], [0, 0, 1, 1], [], []>} : vector<8x8xbf16>, vector<8x256xbf16>, vector<8x256xf32> -> vector<8x256xf32>
    %156 = arith.addf %146, %155 : vector<8x256xf32>
    %c240_i32_109 = arith.constant 240 : i32
    %157 = tpu.dynamic_rotate %5 by %c240_i32_109 dim 1 : vector<8x256xf32>, i32 -> vector<8x256xf32>
    %c7_110 = arith.constant 7 : index
    %c0_111 = arith.constant 0 : index
    %c0_112 = arith.constant 0 : index
    %158 = vector.load %arg6[%c7_110, %c0_111, %c0_112] : memref<9x1x256xf32, #tpu.memory_space<vmem>>, vector<1x1x256xf32>
    %159 = vector.shape_cast %158 : vector<1x1x256xf32> to vector<1x256xf32>
    %160 = vector.broadcast %159 : vector<1x256xf32> to vector<8x256xf32>
    %161 = arith.mulf %157, %160 : vector<8x256xf32>
    %c7_113 = arith.constant 7 : index
    %c0_114 = arith.constant 0 : index
    %c0_115 = arith.constant 0 : index
    %162 = vector.load %arg4[%c7_113, %c0_114, %c0_115] : memref<9x8x8xbf16, #tpu.memory_space<vmem>>, vector<1x8x8xbf16>
    %163 = vector.shape_cast %162 : vector<1x8x8xbf16> to vector<8x8xbf16>
    %164 = arith.truncf %161 : vector<8x256xf32> to vector<8x256xbf16>
    %cst_116 = arith.constant dense<0.000000e+00> : vector<8x256xf32>
    %165 = tpu.matmul %163, %164, %cst_116 {dimension_numbers = #tpu.dot_dimension_numbers<[1], [0], [0], [1], [0, 0, 1, 1], [], []>} : vector<8x8xbf16>, vector<8x256xbf16>, vector<8x256xf32> -> vector<8x256xf32>
    %166 = arith.addf %156, %165 : vector<8x256xf32>
    %c239_i32_117 = arith.constant 239 : i32
    %167 = tpu.dynamic_rotate %5 by %c239_i32_117 dim 1 : vector<8x256xf32>, i32 -> vector<8x256xf32>
    %c8_118 = arith.constant 8 : index
    %c0_119 = arith.constant 0 : index
    %c0_120 = arith.constant 0 : index
    %168 = vector.load %arg6[%c8_118, %c0_119, %c0_120] : memref<9x1x256xf32, #tpu.memory_space<vmem>>, vector<1x1x256xf32>
    %169 = vector.shape_cast %168 : vector<1x1x256xf32> to vector<1x256xf32>
    %170 = vector.broadcast %169 : vector<1x256xf32> to vector<8x256xf32>
    %171 = arith.mulf %167, %170 : vector<8x256xf32>
    %c8_121 = arith.constant 8 : index
    %c0_122 = arith.constant 0 : index
    %c0_123 = arith.constant 0 : index
    %172 = vector.load %arg4[%c8_121, %c0_122, %c0_123] : memref<9x8x8xbf16, #tpu.memory_space<vmem>>, vector<1x8x8xbf16>
    %173 = vector.shape_cast %172 : vector<1x8x8xbf16> to vector<8x8xbf16>
    %174 = arith.truncf %171 : vector<8x256xf32> to vector<8x256xbf16>
    %cst_124 = arith.constant dense<0.000000e+00> : vector<8x256xf32>
    %175 = tpu.matmul %173, %174, %cst_124 {dimension_numbers = #tpu.dot_dimension_numbers<[1], [0], [0], [1], [0, 0, 1, 1], [], []>} : vector<8x8xbf16>, vector<8x256xbf16>, vector<8x256xf32> -> vector<8x256xf32>
    %176 = arith.addf %166, %175 : vector<8x256xf32>
    %cst_125 = arith.constant dense<0.000000e+00> : vector<8xf32>
    %177 = vector.multi_reduction <add>, %176, %cst_125 [1] : vector<8x256xf32> to vector<8xf32>
    %178 = vector.shape_cast %177 : vector<8xf32> to vector<8x1xf32>
    %cst_126 = arith.constant 2.560000e+02 : f32
    %179 = vector.broadcast %cst_126 : f32 to vector<8x1xf32>
    %180 = arith.divf %178, %179 : vector<8x1xf32>
    %181 = vector.broadcast %180 : vector<8x1xf32> to vector<8x256xf32>
    %182 = arith.subf %176, %181 : vector<8x256xf32>
    %183 = arith.mulf %182, %182 : vector<8x256xf32>
    %cst_127 = arith.constant dense<0.000000e+00> : vector<8xf32>
    %184 = vector.multi_reduction <add>, %183, %cst_127 [1] : vector<8x256xf32> to vector<8xf32>
    %185 = vector.shape_cast %184 : vector<8xf32> to vector<8x1xf32>
    %cst_128 = arith.constant 2.560000e+02 : f32
    %186 = vector.broadcast %cst_128 : f32 to vector<8x1xf32>
    %187 = arith.divf %185, %186 : vector<8x1xf32>
    %cst_129 = arith.constant 9.99999974E-6 : f32
    %188 = vector.broadcast %cst_129 : f32 to vector<8x1xf32>
    %189 = arith.addf %187, %188 : vector<8x1xf32>
    %190 = math.rsqrt %189 : vector<8x1xf32>
    %191 = vector.broadcast %190 : vector<8x1xf32> to vector<8x256xf32>
    %192 = arith.mulf %182, %191 : vector<8x256xf32>
    %cst_130 = arith.constant 0.00999999977 : f32
    %193 = vector.broadcast %cst_130 : f32 to vector<8x256xf32>
    %194 = arith.mulf %193, %192 : vector<8x256xf32>
    %195 = arith.maximumf %192, %194 : vector<8x256xf32>
    %cst_131 = arith.constant 0.000000e+00 : f32
    %196 = vector.broadcast %cst_131 : f32 to vector<8x256xf32>
    %c17_i32_132 = arith.constant 17 : i32
    %197 = tpu.dynamic_rotate %195 by %c17_i32_132 dim 1 : vector<8x256xf32>, i32 -> vector<8x256xf32>
    %c0_133 = arith.constant 0 : index
    %c0_134 = arith.constant 0 : index
    %c0_135 = arith.constant 0 : index
    %198 = vector.load %arg6[%c0_133, %c0_134, %c0_135] : memref<9x1x256xf32, #tpu.memory_space<vmem>>, vector<1x1x256xf32>
    %199 = vector.shape_cast %198 : vector<1x1x256xf32> to vector<1x256xf32>
    %200 = vector.broadcast %199 : vector<1x256xf32> to vector<8x256xf32>
    %201 = arith.mulf %197, %200 : vector<8x256xf32>
    %c0_136 = arith.constant 0 : index
    %c0_137 = arith.constant 0 : index
    %c0_138 = arith.constant 0 : index
    %202 = vector.load %arg5[%c0_136, %c0_137, %c0_138] : memref<9x8x8xbf16, #tpu.memory_space<vmem>>, vector<1x8x8xbf16>
    %203 = vector.shape_cast %202 : vector<1x8x8xbf16> to vector<8x8xbf16>
    %204 = arith.truncf %201 : vector<8x256xf32> to vector<8x256xbf16>
    %cst_139 = arith.constant dense<0.000000e+00> : vector<8x256xf32>
    %205 = tpu.matmul %203, %204, %cst_139 {dimension_numbers = #tpu.dot_dimension_numbers<[1], [0], [0], [1], [0, 0, 1, 1], [], []>} : vector<8x8xbf16>, vector<8x256xbf16>, vector<8x256xf32> -> vector<8x256xf32>
    %206 = arith.addf %196, %205 : vector<8x256xf32>
    %c16_i32_140 = arith.constant 16 : i32
    %207 = tpu.dynamic_rotate %195 by %c16_i32_140 dim 1 : vector<8x256xf32>, i32 -> vector<8x256xf32>
    %c1_141 = arith.constant 1 : index
    %c0_142 = arith.constant 0 : index
    %c0_143 = arith.constant 0 : index
    %208 = vector.load %arg6[%c1_141, %c0_142, %c0_143] : memref<9x1x256xf32, #tpu.memory_space<vmem>>, vector<1x1x256xf32>
    %209 = vector.shape_cast %208 : vector<1x1x256xf32> to vector<1x256xf32>
    %210 = vector.broadcast %209 : vector<1x256xf32> to vector<8x256xf32>
    %211 = arith.mulf %207, %210 : vector<8x256xf32>
    %c1_144 = arith.constant 1 : index
    %c0_145 = arith.constant 0 : index
    %c0_146 = arith.constant 0 : index
    %212 = vector.load %arg5[%c1_144, %c0_145, %c0_146] : memref<9x8x8xbf16, #tpu.memory_space<vmem>>, vector<1x8x8xbf16>
    %213 = vector.shape_cast %212 : vector<1x8x8xbf16> to vector<8x8xbf16>
    %214 = arith.truncf %211 : vector<8x256xf32> to vector<8x256xbf16>
    %cst_147 = arith.constant dense<0.000000e+00> : vector<8x256xf32>
    %215 = tpu.matmul %213, %214, %cst_147 {dimension_numbers = #tpu.dot_dimension_numbers<[1], [0], [0], [1], [0, 0, 1, 1], [], []>} : vector<8x8xbf16>, vector<8x256xbf16>, vector<8x256xf32> -> vector<8x256xf32>
    %216 = arith.addf %206, %215 : vector<8x256xf32>
    %c15_i32_148 = arith.constant 15 : i32
    %217 = tpu.dynamic_rotate %195 by %c15_i32_148 dim 1 : vector<8x256xf32>, i32 -> vector<8x256xf32>
    %c2_149 = arith.constant 2 : index
    %c0_150 = arith.constant 0 : index
    %c0_151 = arith.constant 0 : index
    %218 = vector.load %arg6[%c2_149, %c0_150, %c0_151] : memref<9x1x256xf32, #tpu.memory_space<vmem>>, vector<1x1x256xf32>
    %219 = vector.shape_cast %218 : vector<1x1x256xf32> to vector<1x256xf32>
    %220 = vector.broadcast %219 : vector<1x256xf32> to vector<8x256xf32>
    %221 = arith.mulf %217, %220 : vector<8x256xf32>
    %c2_152 = arith.constant 2 : index
    %c0_153 = arith.constant 0 : index
    %c0_154 = arith.constant 0 : index
    %222 = vector.load %arg5[%c2_152, %c0_153, %c0_154] : memref<9x8x8xbf16, #tpu.memory_space<vmem>>, vector<1x8x8xbf16>
    %223 = vector.shape_cast %222 : vector<1x8x8xbf16> to vector<8x8xbf16>
    %224 = arith.truncf %221 : vector<8x256xf32> to vector<8x256xbf16>
    %cst_155 = arith.constant dense<0.000000e+00> : vector<8x256xf32>
    %225 = tpu.matmul %223, %224, %cst_155 {dimension_numbers = #tpu.dot_dimension_numbers<[1], [0], [0], [1], [0, 0, 1, 1], [], []>} : vector<8x8xbf16>, vector<8x256xbf16>, vector<8x256xf32> -> vector<8x256xf32>
    %226 = arith.addf %216, %225 : vector<8x256xf32>
    %c1_i32_156 = arith.constant 1 : i32
    %227 = tpu.dynamic_rotate %195 by %c1_i32_156 dim 1 : vector<8x256xf32>, i32 -> vector<8x256xf32>
    %c3_157 = arith.constant 3 : index
    %c0_158 = arith.constant 0 : index
    %c0_159 = arith.constant 0 : index
    %228 = vector.load %arg6[%c3_157, %c0_158, %c0_159] : memref<9x1x256xf32, #tpu.memory_space<vmem>>, vector<1x1x256xf32>
    %229 = vector.shape_cast %228 : vector<1x1x256xf32> to vector<1x256xf32>
    %230 = vector.broadcast %229 : vector<1x256xf32> to vector<8x256xf32>
    %231 = arith.mulf %227, %230 : vector<8x256xf32>
    %c3_160 = arith.constant 3 : index
    %c0_161 = arith.constant 0 : index
    %c0_162 = arith.constant 0 : index
    %232 = vector.load %arg5[%c3_160, %c0_161, %c0_162] : memref<9x8x8xbf16, #tpu.memory_space<vmem>>, vector<1x8x8xbf16>
    %233 = vector.shape_cast %232 : vector<1x8x8xbf16> to vector<8x8xbf16>
    %234 = arith.truncf %231 : vector<8x256xf32> to vector<8x256xbf16>
    %cst_163 = arith.constant dense<0.000000e+00> : vector<8x256xf32>
    %235 = tpu.matmul %233, %234, %cst_163 {dimension_numbers = #tpu.dot_dimension_numbers<[1], [0], [0], [1], [0, 0, 1, 1], [], []>} : vector<8x8xbf16>, vector<8x256xbf16>, vector<8x256xf32> -> vector<8x256xf32>
    %236 = arith.addf %226, %235 : vector<8x256xf32>
    %c4_164 = arith.constant 4 : index
    %c0_165 = arith.constant 0 : index
    %c0_166 = arith.constant 0 : index
    %237 = vector.load %arg5[%c4_164, %c0_165, %c0_166] : memref<9x8x8xbf16, #tpu.memory_space<vmem>>, vector<1x8x8xbf16>
    %238 = vector.shape_cast %237 : vector<1x8x8xbf16> to vector<8x8xbf16>
    %239 = arith.truncf %195 : vector<8x256xf32> to vector<8x256xbf16>
    %cst_167 = arith.constant dense<0.000000e+00> : vector<8x256xf32>
    %240 = tpu.matmul %238, %239, %cst_167 {dimension_numbers = #tpu.dot_dimension_numbers<[1], [0], [0], [1], [0, 0, 1, 1], [], []>} : vector<8x8xbf16>, vector<8x256xbf16>, vector<8x256xf32> -> vector<8x256xf32>
    %241 = arith.addf %236, %240 : vector<8x256xf32>
    %c255_i32_168 = arith.constant 255 : i32
    %242 = tpu.dynamic_rotate %195 by %c255_i32_168 dim 1 : vector<8x256xf32>, i32 -> vector<8x256xf32>
    %c5_169 = arith.constant 5 : index
    %c0_170 = arith.constant 0 : index
    %c0_171 = arith.constant 0 : index
    %243 = vector.load %arg6[%c5_169, %c0_170, %c0_171] : memref<9x1x256xf32, #tpu.memory_space<vmem>>, vector<1x1x256xf32>
    %244 = vector.shape_cast %243 : vector<1x1x256xf32> to vector<1x256xf32>
    %245 = vector.broadcast %244 : vector<1x256xf32> to vector<8x256xf32>
    %246 = arith.mulf %242, %245 : vector<8x256xf32>
    %c5_172 = arith.constant 5 : index
    %c0_173 = arith.constant 0 : index
    %c0_174 = arith.constant 0 : index
    %247 = vector.load %arg5[%c5_172, %c0_173, %c0_174] : memref<9x8x8xbf16, #tpu.memory_space<vmem>>, vector<1x8x8xbf16>
    %248 = vector.shape_cast %247 : vector<1x8x8xbf16> to vector<8x8xbf16>
    %249 = arith.truncf %246 : vector<8x256xf32> to vector<8x256xbf16>
    %cst_175 = arith.constant dense<0.000000e+00> : vector<8x256xf32>
    %250 = tpu.matmul %248, %249, %cst_175 {dimension_numbers = #tpu.dot_dimension_numbers<[1], [0], [0], [1], [0, 0, 1, 1], [], []>} : vector<8x8xbf16>, vector<8x256xbf16>, vector<8x256xf32> -> vector<8x256xf32>
    %251 = arith.addf %241, %250 : vector<8x256xf32>
    %c241_i32_176 = arith.constant 241 : i32
    %252 = tpu.dynamic_rotate %195 by %c241_i32_176 dim 1 : vector<8x256xf32>, i32 -> vector<8x256xf32>
    %c6_177 = arith.constant 6 : index
    %c0_178 = arith.constant 0 : index
    %c0_179 = arith.constant 0 : index
    %253 = vector.load %arg6[%c6_177, %c0_178, %c0_179] : memref<9x1x256xf32, #tpu.memory_space<vmem>>, vector<1x1x256xf32>
    %254 = vector.shape_cast %253 : vector<1x1x256xf32> to vector<1x256xf32>
    %255 = vector.broadcast %254 : vector<1x256xf32> to vector<8x256xf32>
    %256 = arith.mulf %252, %255 : vector<8x256xf32>
    %c6_180 = arith.constant 6 : index
    %c0_181 = arith.constant 0 : index
    %c0_182 = arith.constant 0 : index
    %257 = vector.load %arg5[%c6_180, %c0_181, %c0_182] : memref<9x8x8xbf16, #tpu.memory_space<vmem>>, vector<1x8x8xbf16>
    %258 = vector.shape_cast %257 : vector<1x8x8xbf16> to vector<8x8xbf16>
    %259 = arith.truncf %256 : vector<8x256xf32> to vector<8x256xbf16>
    %cst_183 = arith.constant dense<0.000000e+00> : vector<8x256xf32>
    %260 = tpu.matmul %258, %259, %cst_183 {dimension_numbers = #tpu.dot_dimension_numbers<[1], [0], [0], [1], [0, 0, 1, 1], [], []>} : vector<8x8xbf16>, vector<8x256xbf16>, vector<8x256xf32> -> vector<8x256xf32>
    %261 = arith.addf %251, %260 : vector<8x256xf32>
    %c240_i32_184 = arith.constant 240 : i32
    %262 = tpu.dynamic_rotate %195 by %c240_i32_184 dim 1 : vector<8x256xf32>, i32 -> vector<8x256xf32>
    %c7_185 = arith.constant 7 : index
    %c0_186 = arith.constant 0 : index
    %c0_187 = arith.constant 0 : index
    %263 = vector.load %arg6[%c7_185, %c0_186, %c0_187] : memref<9x1x256xf32, #tpu.memory_space<vmem>>, vector<1x1x256xf32>
    %264 = vector.shape_cast %263 : vector<1x1x256xf32> to vector<1x256xf32>
    %265 = vector.broadcast %264 : vector<1x256xf32> to vector<8x256xf32>
    %266 = arith.mulf %262, %265 : vector<8x256xf32>
    %c7_188 = arith.constant 7 : index
    %c0_189 = arith.constant 0 : index
    %c0_190 = arith.constant 0 : index
    %267 = vector.load %arg5[%c7_188, %c0_189, %c0_190] : memref<9x8x8xbf16, #tpu.memory_space<vmem>>, vector<1x8x8xbf16>
    %268 = vector.shape_cast %267 : vector<1x8x8xbf16> to vector<8x8xbf16>
    %269 = arith.truncf %266 : vector<8x256xf32> to vector<8x256xbf16>
    %cst_191 = arith.constant dense<0.000000e+00> : vector<8x256xf32>
    %270 = tpu.matmul %268, %269, %cst_191 {dimension_numbers = #tpu.dot_dimension_numbers<[1], [0], [0], [1], [0, 0, 1, 1], [], []>} : vector<8x8xbf16>, vector<8x256xbf16>, vector<8x256xf32> -> vector<8x256xf32>
    %271 = arith.addf %261, %270 : vector<8x256xf32>
    %c239_i32_192 = arith.constant 239 : i32
    %272 = tpu.dynamic_rotate %195 by %c239_i32_192 dim 1 : vector<8x256xf32>, i32 -> vector<8x256xf32>
    %c8_193 = arith.constant 8 : index
    %c0_194 = arith.constant 0 : index
    %c0_195 = arith.constant 0 : index
    %273 = vector.load %arg6[%c8_193, %c0_194, %c0_195] : memref<9x1x256xf32, #tpu.memory_space<vmem>>, vector<1x1x256xf32>
    %274 = vector.shape_cast %273 : vector<1x1x256xf32> to vector<1x256xf32>
    %275 = vector.broadcast %274 : vector<1x256xf32> to vector<8x256xf32>
    %276 = arith.mulf %272, %275 : vector<8x256xf32>
    %c8_196 = arith.constant 8 : index
    %c0_197 = arith.constant 0 : index
    %c0_198 = arith.constant 0 : index
    %277 = vector.load %arg5[%c8_196, %c0_197, %c0_198] : memref<9x8x8xbf16, #tpu.memory_space<vmem>>, vector<1x8x8xbf16>
    %278 = vector.shape_cast %277 : vector<1x8x8xbf16> to vector<8x8xbf16>
    %279 = arith.truncf %276 : vector<8x256xf32> to vector<8x256xbf16>
    %cst_199 = arith.constant dense<0.000000e+00> : vector<8x256xf32>
    %280 = tpu.matmul %278, %279, %cst_199 {dimension_numbers = #tpu.dot_dimension_numbers<[1], [0], [0], [1], [0, 0, 1, 1], [], []>} : vector<8x8xbf16>, vector<8x256xbf16>, vector<8x256xf32> -> vector<8x256xf32>
    %281 = arith.addf %271, %280 : vector<8x256xf32>
    %cst_200 = arith.constant dense<0.000000e+00> : vector<8xf32>
    %282 = vector.multi_reduction <add>, %281, %cst_200 [1] : vector<8x256xf32> to vector<8xf32>
    %283 = vector.shape_cast %282 : vector<8xf32> to vector<8x1xf32>
    %cst_201 = arith.constant 2.560000e+02 : f32
    %284 = vector.broadcast %cst_201 : f32 to vector<8x1xf32>
    %285 = arith.divf %283, %284 : vector<8x1xf32>
    %286 = vector.broadcast %285 : vector<8x1xf32> to vector<8x256xf32>
    %287 = arith.subf %281, %286 : vector<8x256xf32>
    %288 = arith.mulf %287, %287 : vector<8x256xf32>
    %cst_202 = arith.constant dense<0.000000e+00> : vector<8xf32>
    %289 = vector.multi_reduction <add>, %288, %cst_202 [1] : vector<8x256xf32> to vector<8xf32>
    %290 = vector.shape_cast %289 : vector<8xf32> to vector<8x1xf32>
    %cst_203 = arith.constant 2.560000e+02 : f32
    %291 = vector.broadcast %cst_203 : f32 to vector<8x1xf32>
    %292 = arith.divf %290, %291 : vector<8x1xf32>
    %cst_204 = arith.constant 9.99999974E-6 : f32
    %293 = vector.broadcast %cst_204 : f32 to vector<8x1xf32>
    %294 = arith.addf %292, %293 : vector<8x1xf32>
    %295 = math.rsqrt %294 : vector<8x1xf32>
    %296 = vector.broadcast %295 : vector<8x1xf32> to vector<8x256xf32>
    %297 = arith.mulf %287, %296 : vector<8x256xf32>
    %cst_205 = arith.constant 0.00999999977 : f32
    %298 = vector.broadcast %cst_205 : f32 to vector<8x256xf32>
    %299 = arith.mulf %298, %297 : vector<8x256xf32>
    %300 = arith.maximumf %297, %299 : vector<8x256xf32>
    %c0_206 = arith.constant 0 : index
    %c0_207 = arith.constant 0 : index
    %c0_208 = arith.constant 0 : index
    %301 = vector.load %arg7[%c0_206, %c0_207, %c0_208] : memref<1x8x256xf32, #tpu.memory_space<vmem>>, vector<1x8x256xf32>
    %302 = vector.shape_cast %301 : vector<1x8x256xf32> to vector<8x256xf32>
    %303 = vector.shape_cast %300 : vector<8x256xf32> to vector<1x8x256xf32>
    tpu.vector_store %arg7[%c0_206, %c0_207, %c0_208], %303 {strides = array<i32>} : memref<1x8x256xf32, #tpu.memory_space<vmem>>, vector<1x8x256xf32>,
    return
  }
  func.func @transform_0(%arg0: i32) -> (i32, i32, i32) {
    %c0_i32 = arith.constant 0 : i32
    %c0_i32_0 = arith.constant 0 : i32
    %c0_i32_1 = arith.constant 0 : i32
    return %arg0, %c0_i32, %c0_i32_0 : i32, i32, i32
  }
  func.func @transform_1(%arg0: i32) -> (i32, i32, i32) {
    %c0_i32 = arith.constant 0 : i32
    %c0_i32_0 = arith.constant 0 : i32
    %c0_i32_1 = arith.constant 0 : i32
    return %arg0, %c0_i32, %c0_i32_0 : i32, i32, i32
  }
  func.func @transform_2(%arg0: i32) -> (i32, i32, i32) {
    %c0_i32 = arith.constant 0 : i32
    %c0_i32_0 = arith.constant 0 : i32
    %c0_i32_1 = arith.constant 0 : i32
    %c0_i32_2 = arith.constant 0 : i32
    return %c0_i32, %c0_i32_0, %c0_i32_1 : i32, i32, i32
  }
  func.func @transform_3(%arg0: i32) -> (i32, i32, i32) {
    %c0_i32 = arith.constant 0 : i32
    %c0_i32_0 = arith.constant 0 : i32
    %c0_i32_1 = arith.constant 0 : i32
    %c0_i32_2 = arith.constant 0 : i32
    return %c0_i32, %c0_i32_0, %c0_i32_1 : i32, i32, i32
  }
  func.func @transform_4(%arg0: i32) -> (i32, i32, i32) {
    %c0_i32 = arith.constant 0 : i32
    %c0_i32_0 = arith.constant 0 : i32
    %c0_i32_1 = arith.constant 0 : i32
    %c0_i32_2 = arith.constant 0 : i32
    return %c0_i32, %c0_i32_0, %c0_i32_1 : i32, i32, i32
  }
  func.func @transform_5(%arg0: i32) -> (i32, i32, i32) {
    %c0_i32 = arith.constant 0 : i32
    %c0_i32_0 = arith.constant 0 : i32
    %c0_i32_1 = arith.constant 0 : i32
    %c0_i32_2 = arith.constant 0 : i32
    return %c0_i32, %c0_i32_0, %c0_i32_1 : i32, i32, i32
  }
  func.func @transform_6(%arg0: i32) -> (i32, i32, i32) {
    %c0_i32 = arith.constant 0 : i32
    %c0_i32_0 = arith.constant 0 : i32
    %c0_i32_1 = arith.constant 0 : i32
    return %arg0, %c0_i32, %c0_i32_0 : i32, i32, i32
  }
}

</mosaic_0001>

<llo_original>
// kernel: unest_block_forward.1
$region0: #{unest_block_forward.1}
  #allocation0 [shape = 'u32[]', space=smem, size = 0x4, offset = 0x4, fixed_abs, tag = 'smem constant byte address 0x4 - core index']
  #allocation1 [shape = 'u32[144,128]{1,0:T(1,128)}', space=vmem, size = 0x12000, scoped, tag = 'internal scratch']
  %s0 = inlined_call_operand.vmem [shape: bf16[2,8,256], index: 0, kind: input, shape index: {}]
  %s1 = inlined_call_operand.vmem [shape: bf16[2,8,256], index: 1, kind: input, shape index: {}]
  %s2 = inlined_call_operand.vmem [shape: bf16[9,8,8], index: 2, kind: input, shape index: {}]
  %s3 = inlined_call_operand.vmem [shape: bf16[9,8,8], index: 3, kind: input, shape index: {}]
  %s4 = inlined_call_operand.vmem [shape: bf16[9,8,8], index: 4, kind: input, shape index: {}]
  %s5 = inlined_call_operand.vmem [shape: f32[9,1,256], index: 5, kind: input, shape index: {}]
  %s6 = inlined_call_operand.vmem [shape: f32[2,8,256], index: 6, kind: output, shape index: {}]
  %s7 = sld [smem:[#allocation0]]
  $region57: #{unest_block_forward.1} parent=0
    _
  %s9 = ssub.s32 1, %s7
  %s10 = scalar_select 0, %s9, %s7
  loop: start=0, step=1, limit=4
  $region2: #{unest_block_forward.1} parent=0 // loop_pre_header
    _
  $region3: #{unest_block_forward.1} parent=0 // loop_header
    %s12 = sphi 0, %s16
    %p13 = scmp.ge.s32.totalorder %s12, 4
    %s22 = sphi 0, %s24
    %s25 = sphi 0, %s22
    %s26 = sphi 0, %s25
    %s42 = sphi 0, %s26
    %s48 = sphi 0, %s50
    %s51 = sphi 0, %s48
    %s52 = sphi 0, %s51
    %s68 = sphi 0, %s52
    %s72 = sphi 0, %s72
    %s74 = sphi 0, %s72
    %s75 = sphi 0, %s74
    %s89 = sphi 0, %s75
    %s93 = sphi 0, %s93
    %s95 = sphi 0, %s93
    %s96 = sphi 0, %s95
    %s110 = sphi 0, %s96
    %s114 = sphi 0, %s114
    %s116 = sphi 0, %s114
    %s117 = sphi 0, %s116
    %s131 = sphi 0, %s117
    %s135 = sphi 0, %s135
    %s137 = sphi 0, %s135
    %s138 = sphi 0, %s137
    %s152 = sphi 0, %s138
    %s158 = sphi 0, %s160
    %s161 = sphi 0, %s158
    %s162 = sphi 0, %s161
    %s178 = sphi 0, %s162
  $region4: #{unest_block_forward.1} parent=0 // loop_header_branch
    %15 = sbr.rel (%p13) target = $region8
  $region5: #{unest_block_forward.1} parent=0 // loop_body
    %s17 = ssub.s32 %s12, 1
    %s18 = ssub.s32 %s12, 2
    %s19 = sadd.s32 %s12, 1
    %s20 = ssub.s32 %s12, %s19
    %p21 = scmp.eq.s32.totalorder %s20, 0
    %s23 = sadd.s32 %s22, 1
    %s24 = scalar_select %p21, %s22, %s23
    %p27 = pneg %p21
    %p28 = scmp.eq.s32.totalorder %s12, 1
    %p29 = por %p27, %p28
    %p30 = scmp.ne.s32.totalorder %s22, %s25
    %p31 = scmp.eq.s32.totalorder %s12, 0
    %p32 = por %p30, %p31
    %p33 = scmp.ne.s32.totalorder %s22, %s25
    %p34 = scmp.eq.s32.totalorder %s17, 1
    %p35 = por %p33, %p34
    %p36 = scmp.ne.s32.totalorder %s25, %s26
    %p37 = scmp.eq.s32.totalorder %s17, 0
    %p38 = por %p36, %p37
    %p39 = scmp.ne.s32.totalorder %s25, %s26
    %p40 = scmp.eq.s32.totalorder %s18, 1
    %p41 = por %p39, %p40
    %p43 = scmp.ne.s32.totalorder %s26, %s42
    %p44 = scmp.eq.s32.totalorder %s18, 0
    %p45 = por %p43, %p44
    %s46 = ssub.s32 %s12, %s19
    %p47 = scmp.eq.s32.totalorder %s46, 0
    %s49 = sadd.s32 %s48, 1
    %s50 = scalar_select %p47, %s48, %s49
    %p53 = pneg %p47
    %p54 = scmp.eq.s32.totalorder %s12, 1
    %p55 = por %p53, %p54
    %p56 = scmp.ne.s32.totalorder %s48, %s51
    %p57 = scmp.eq.s32.totalorder %s12, 0
    %p58 = por %p56, %p57
    %p59 = scmp.ne.s32.totalorder %s48, %s51
    %p60 = scmp.eq.s32.totalorder %s17, 1
    %p61 = por %p59, %p60
    %p62 = scmp.ne.s32.totalorder %s51, %s52
    %p63 = scmp.eq.s32.totalorder %s17, 0
    %p64 = por %p62, %p63
    %p65 = scmp.ne.s32.totalorder %s51, %s52
    %p66 = scmp.eq.s32.totalorder %s18, 1
    %p67 = por %p65, %p66
    %p69 = scmp.ne.s32.totalorder %s52, %s68
    %p70 = scmp.eq.s32.totalorder %s18, 0
    %p71 = por %p69, %p70
    %s73 = sadd.s32 %s72, 1
    %p76 = scmp.eq.s32.totalorder %s12, 1
    %p77 = scmp.ne.s32.totalorder %s72, %s74
    %p78 = scmp.eq.s32.totalorder %s12, 0
    %p79 = por %p77, %p78
    %p80 = scmp.ne.s32.totalorder %s72, %s74
    %p81 = scmp.eq.s32.totalorder %s17, 1
    %p82 = por %p80, %p81
    %p83 = scmp.ne.s32.totalorder %s74, %s75
    %p84 = scmp.eq.s32.totalorder %s17, 0
    %p85 = por %p83, %p84
    %p86 = scmp.ne.s32.totalorder %s74, %s75
    %p87 = scmp.eq.s32.totalorder %s18, 1
    %p88 = por %p86, %p87
    %p90 = scmp.ne.s32.totalorder %s75, %s89
    %p91 = scmp.eq.s32.totalorder %s18, 0
    %p92 = por %p90, %p91
    %s94 = sadd.s32 %s93, 1
    %p97 = scmp.eq.s32.totalorder %s12, 1
    %p98 = scmp.ne.s32.totalorder %s93, %s95
    %p99 = scmp.eq.s32.totalorder %s12, 0
    %p100 = por %p98, %p99
    %p101 = scmp.ne.s32.totalorder %s93, %s95
    %p102 = scmp.eq.s32.totalorder %s17, 1
    %p103 = por %p101, %p102
    %p104 = scmp.ne.s32.totalorder %s95, %s96
    %p105 = scmp.eq.s32.totalorder %s17, 0
    %p106 = por %p104, %p105
    %p107 = scmp.ne.s32.totalorder %s95, %s96
    %p108 = scmp.eq.s32.totalorder %s18, 1
    %p109 = por %p107, %p108
    %p111 = scmp.ne.s32.totalorder %s96, %s110
    %p112 = scmp.eq.s32.totalorder %s18, 0
    %p113 = por %p111, %p112
    %s115 = sadd.s32 %s114, 1
    %p118 = scmp.eq.s32.totalorder %s12, 1
    %p119 = scmp.ne.s32.totalorder %s114, %s116
    %p120 = scmp.eq.s32.totalorder %s12, 0
    %p121 = por %p119, %p120
    %p122 = scmp.ne.s32.totalorder %s114, %s116
    %p123 = scmp.eq.s32.totalorder %s17, 1
    %p124 = por %p122, %p123
    %p125 = scmp.ne.s32.totalorder %s116, %s117
    %p126 = scmp.eq.s32.totalorder %s17, 0
    %p127 = por %p125, %p126
    %p128 = scmp.ne.s32.totalorder %s116, %s117
    %p129 = scmp.eq.s32.totalorder %s18, 1
    %p130 = por %p128, %p129
    %p132 = scmp.ne.s32.totalorder %s117, %s131
    %p133 = scmp.eq.s32.totalorder %s18, 0
    %p134 = por %p132, %p133
    %s136 = sadd.s32 %s135, 1
    %p139 = scmp.eq.s32.totalorder %s12, 1
    %p140 = scmp.ne.s32.totalorder %s135, %s137
    %p141 = scmp.eq.s32.totalorder %s12, 0
    %p142 = por %p140, %p141
    %p143 = scmp.ne.s32.totalorder %s135, %s137
    %p144 = scmp.eq.s32.totalorder %s17, 1
    %p145 = por %p143, %p144
    %p146 = scmp.ne.s32.totalorder %s137, %s138
    %p147 = scmp.eq.s32.totalorder %s17, 0
    %p148 = por %p146, %p147
    %p149 = scmp.ne.s32.totalorder %s137, %s138
    %p150 = scmp.eq.s32.totalorder %s18, 1
    %p151 = por %p149, %p150
    %p153 = scmp.ne.s32.totalorder %s138, %s152
    %p154 = scmp.eq.s32.totalorder %s18, 0
    %p155 = por %p153, %p154
    %s156 = ssub.s32 %s12, %s19
    %p157 = scmp.eq.s32.totalorder %s156, 0
    %s159 = sadd.s32 %s158, 1
    %s160 = scalar_select %p157, %s158, %s159
    %p163 = pneg %p157
    %p164 = scmp.eq.s32.totalorder %s12, 1
    %p165 = por %p163, %p164
    %p166 = scmp.ne.s32.totalorder %s158, %s161
    %p167 = scmp.eq.s32.totalorder %s12, 0
    %p168 = por %p166, %p167
    %p169 = scmp.ne.s32.totalorder %s158, %s161
    %p170 = scmp.eq.s32.totalorder %s17, 1
    %p171 = por %p169, %p170
    %p172 = scmp.ne.s32.totalorder %s161, %s162
    %p173 = scmp.eq.s32.totalorder %s17, 0
    %p174 = por %p172, %p173
    %p175 = scmp.ne.s32.totalorder %s161, %s162
    %p176 = scmp.eq.s32.totalorder %s18, 1
    %p177 = por %p175, %p176
    %p179 = scmp.ne.s32.totalorder %s162, %s178
    %p180 = scmp.eq.s32.totalorder %s18, 0
    %p181 = por %p179, %p180
    %p182 = scmp.le.s32.totalorder 1, %s12
    %p183 = scmp.lt.s32.totalorder %s12, 3
    %p184 = pnand %p182, %p183
    %p185 = pneg %p184
    // Predicated region
    $region9: #{unest_block_forward.1} parent=5 // pred_check
      _
    $region10: #{unest_block_forward.1} parent=5 // pred_check_branch
      %187 = sbr.rel (%p184) target = $region12
    $region11: #{unest_block_forward.1} parent=5 // pred_region
      %s188 = ssub.s32 %s12, 1
      // Predicated region
      $region13: #{unest_block_forward.1} parent=11 // pred_check
        %p189 = pneg %p85
      $region14: #{unest_block_forward.1} parent=11 // pred_check_branch
        %191 = sbr.rel (%p189) target = $region16
      $region15: #{unest_block_forward.1} parent=11 // pred_region
        _
      $region16: #{unest_block_forward.1} parent=11 // pred_fallthru
        _
      // Predicated region
      $region17: #{unest_block_forward.1} parent=11 // pred_check
        %p192 = pneg %p106
      $region18: #{unest_block_forward.1} parent=11 // pred_check_branch
        %194 = sbr.rel (%p192) target = $region20
      $region19: #{unest_block_forward.1} parent=11 // pred_region
        _
      $region20: #{unest_block_forward.1} parent=11 // pred_fallthru
        _
      // Predicated region
      $region21: #{unest_block_forward.1} parent=11 // pred_check
        %p195 = pneg %p127
      $region22: #{unest_block_forward.1} parent=11 // pred_check_branch
        %197 = sbr.rel (%p195) target = $region24
      $region23: #{unest_block_forward.1} parent=11 // pred_region
        _
      $region24: #{unest_block_forward.1} parent=11 // pred_fallthru
        _
      // Predicated region
      $region25: #{unest_block_forward.1} parent=11 // pred_check
        %p198 = pneg %p148
      $region26: #{unest_block_forward.1} parent=11 // pred_check_branch
        %200 = sbr.rel (%p198) target = $region28
      $region27: #{unest_block_forward.1} parent=11 // pred_region
        _
      $region28: #{unest_block_forward.1} parent=11 // pred_fallthru
        _
    $region12: #{unest_block_forward.1} parent=5 // pred_fallthru
      _
    %p201 = scmp.lt.s32.totalorder %s12, 2
    // Predicated region
    $region29: #{unest_block_forward.1} parent=5 // pred_check
      %p202 = pneg %p201
    $region30: #{unest_block_forward.1} parent=5 // pred_check_branch
      %204 = sbr.rel (%p202) target = $region32
    $region31: #{unest_block_forward.1} parent=5 // pred_region
      // Predicated region
      $region33: #{unest_block_forward.1} parent=31 // pred_check
        %p205 = pneg %p32
      $region34: #{unest_block_forward.1} parent=31 // pred_check_branch
        %207 = sbr.rel (%p205) target = $region36
      $region35: #{unest_block_forward.1} parent=31 // pred_region
        %p208 = scmp.lt.s32.totalorder %s12, 1
        %s209 = scalar_select %p208, %s12, 1
        %s210 = smul.addr %s209, 2
        %s211 = smul.addr %s210, 4
        %s212 = scalar_lea.vmem %s0, %s211
      $region36: #{unest_block_forward.1} parent=31 // pred_fallthru
        _
      // Predicated region
      $region37: #{unest_block_forward.1} parent=31 // pred_check
        %p213 = pneg %p58
      $region38: #{unest_block_forward.1} parent=31 // pred_check_branch
        %215 = sbr.rel (%p213) target = $region40
      $region39: #{unest_block_forward.1} parent=31 // pred_region
        %p216 = scmp.lt.s32.totalorder %s12, 1
        %s217 = scalar_select %p216, %s12, 1
        %s218 = smul.addr %s217, 2
        %s219 = smul.addr %s218, 4
        %s220 = scalar_lea.vmem %s1, %s219
      $region40: #{unest_block_forward.1} parent=31 // pred_fallthru
        _
    $region32: #{unest_block_forward.1} parent=5 // pred_fallthru
      _
    %p221 = scmp.le.s32.totalorder 1, %s12
    %p222 = scmp.lt.s32.totalorder %s12, 3
    %p223 = pnand %p221, %p222
    %p224 = pneg %p223
    // Predicated region
    $region41: #{unest_block_forward.1} parent=5 // pred_check
      _
    $region42: #{unest_block_forward.1} parent=5 // pred_check_branch
      %226 = sbr.rel (%p223) target = $region44
    $region43: #{unest_block_forward.1} parent=5 // pred_region
      %s227 = ssub.s32 %s12, 1
      %p228 = scmp.lt.s32.totalorder %s17, 1
      %s229 = scalar_select %p228, %s17, 1
      %s230 = smul.addr %s229, 2
      %s231 = smul.addr %s230, 4
      %s232 = scalar_lea.vmem %s0, %s231
      %p233 = pneg %p38
      %p234 = pneg %p35
      %p235 = scmp.lt.s32.totalorder %s17, 1
      %s236 = scalar_select %p235, %s17, 1
      %s237 = smul.addr %s236, 2
      %s238 = smul.addr %s237, 4
      %s239 = scalar_lea.vmem %s1, %s238
      %p240 = pneg %p64
      %p241 = pneg %p61
      %p242 = pneg %p85
      %p243 = pneg %p82
      %p244 = pneg %p106
      %p245 = pneg %p103
      %p246 = pneg %p127
      %p247 = pneg %p124
      %p248 = pneg %p148
      %p249 = pneg %p145
      %p250 = pneg %p174
      %p251 = pneg %p171
      %p252 = scmp.lt.s32.totalorder %s17, 1
      %s253 = scalar_select %p252, %s17, 1
      %s254 = smul.addr %s253, 2
      %s255 = smul.addr %s254, 8
      %s256 = scalar_lea.vmem %s6, %s255
      %p257 = scmp.lt.s32.totalorder %s17, 1
      %s258 = scalar_select %p257, %s17, 1
      %s259 = smul.addr %s258, 2
      %s260 = smul.addr %s259, 4
      %s261 = scalar_lea.vmem %s0, %s260
      %p262 = scmp.lt.s32.totalorder %s17, 1
      %s263 = scalar_select %p262, %s17, 1
      %s264 = smul.addr %s263, 2
      %s265 = smul.addr %s264, 4
      %s266 = scalar_lea.vmem %s1, %s265
      %p267 = scmp.lt.s32.totalorder %s17, 1
      %s268 = scalar_select %p267, %s17, 1
      %s269 = smul.addr %s268, 2
      %s270 = smul.addr %s269, 8
      %s271 = scalar_lea.vmem %s6, %s270
      %v273 = vld [vmem:[%s261] sm:$0xff]
      %v274 = vunpack.c.l.bf16 %v273
      %v275 = vunpack.c.h.bf16 %v273
      %v276 = vld [vmem:[%s266] sm:$0xff]
      %v277 = vunpack.c.l.bf16 %v276
      %v278 = vunpack.c.h.bf16 %v276
      %279 = vrot.lane.b32.xlu0 %v274, 17
      %v280 = vpop.permute.xlu0 %279
      %281 = vrot.lane.b32.xlu0 %v275, 17
      %v282 = vpop.permute.xlu0 %281
      %v283 = vlaneseq
      %v284 = vand.u32 %v283, 127
      %vm285 = vcmp.lt.s32.totalorder %v284, 17
      %v286 = vsel %vm285, %v280, %v282
      %v287 = vsel %vm285, %v282, %v280
      %v288 = vld [vmem:[%s5] sm:$0x3]
      %v290 = vlaneseq
      %v291 = vshrl.u32 %v290, 7
      %v292 = vsub.s32 0, %v291
      %v293 = vrot.slane %v288, %v292
      %v294 = vlaneseq
      %v295 = vshrl.u32 %v294, 7
      %v296 = vsub.s32 1, %v295
      %v297 = vrot.slane %v288, %v296
      %v300 = vmul.f32 %v287, %v293
      %v301 = vmul.f32 %v286, %v297
      %v302 = vld [vmem:[%s2] sm:$0xf]
      %v303 = vpack.c.bf16 %v300, %v300
      %v304 = vpack.c.bf16 %v301, %v301
      %305 = vrot.lane.b32.xlu0 %v274, 16
      %v306 = vpop.permute.xlu0 %305
      %307 = vrot.lane.b32.xlu0 %v275, 16
      %v308 = vpop.permute.xlu0 %307
      %vm309 = vcmp.lt.s32.totalorder %v284, 16
      %v310 = vsel %vm309, %v306, %v308
      %v311 = vsel %vm309, %v308, %v306
      %s312 = scalar_lea.vmem %s5, 2
      %v313 = vld [vmem:[%s312] sm:$0x3]
      %v315 = vlaneseq
      %v316 = vshrl.u32 %v315, 7
      %v317 = vsub.s32 0, %v316
      %v318 = vrot.slane %v313, %v317
      %v319 = vlaneseq
      %v320 = vshrl.u32 %v319, 7
      %v321 = vsub.s32 1, %v320
      %v322 = vrot.slane %v313, %v321
      %v325 = vmul.f32 %v311, %v318
      %v326 = vmul.f32 %v310, %v322
      %s327 = scalar_lea.vmem %s2, 4
      %v328 = vld [vmem:[%s327] sm:$0xf]
      %v329 = vpack.c.bf16 %v325, %v325
      %v330 = vpack.c.bf16 %v326, %v326
      %vm331 = vcmask 64512
      %v333 = vsel %vm331, %v328, 0
      %vm335 = vcmask 1043456
      %v337 = vsel %vm335, %v329, 0
      %v340 = vsel %vm335, %v330, 0
      %342 = vmatprep.subr.bf16.mxu0 %v340
      %343 = vmatpush1.bf16.msra.mxu0 %v337
      %344 = vmatprep.subr.bf16.mxu0 0
      %345 = vmatpush1.bf16.msra.mxu0 0
      %346 = vmatprep.subr.bf16.mxu0 0
      %347 = vmatpush1.bf16.msra.mxu0 0
      %348 = vmatprep.subr.bf16.mxu0 0
      %349 = vmatpush1.bf16.msra.mxu0 0
      %350 = vmatprep.subr.bf16.mxu0 0
      %351 = vmatpush1.bf16.msra.mxu0 0
      %352 = vmatprep.subr.bf16.mxu0 0
      %353 = vmatpush1.bf16.msra.mxu0 0
      %354 = vmatprep.subr.bf16.mxu0 0
      %355 = vmatpush1.bf16.msra.mxu0 0
      %356 = vmatprep.subr.bf16.mxu0 0
      %357 = vmatpush1.bf16.msra.mxu0 0
      %358 = vmatprep.subr.bf16.mxu0 0
      %359 = vmatpush1.bf16.msra.mxu0 0
      %360 = vmatprep.subr.bf16.mxu0 0
      %361 = vmatpush1.bf16.msra.mxu0 0
      %362 = vmatprep.subr.bf16.mxu0 0
      %363 = vmatpush1.bf16.msra.mxu0 0
      %364 = vmatprep.subr.bf16.mxu0 0
      %365 = vmatpush1.bf16.msra.mxu0 0
      %366 = vmatprep.subr.bf16.mxu0 0
      %367 = vmatpush1.bf16.msra.mxu0 0
      %368 = vmatprep.subr.bf16.mxu0 0
      %369 = vmatpush1.bf16.msra.mxu0 0
      %370 = vmatprep.subr.bf16.mxu0 0
      %371 = vmatpush1.bf16.msra.mxu0 0
      %372 = vmatprep.subr.bf16.mxu0 0
      %373 = vmatpush1.bf16.msra.mxu0 0
      %374 = vmatprep.mubr.bf16.mxu0 0
      %375 = vmatmul.mubr.bf16.gmra.mrb[0].mxu0 %v333
      %v376 = vpop.f32.mrb[0].mxu0
      %v377 = vadd.f32 0.0, %v376
      %v378 = vpop.f32.mrb[0].mxu0
      %v379 = vadd.f32 0.0, %v378
      %v380 = vpop.f32.mrb[0].mxu0
      %v381 = vpop.f32.mrb[0].mxu0
      %382 = vdwg.mxu0
      %v384 = vsel %vm331, %v302, 0
      %v387 = vsel %vm335, %v303, 0
      %v390 = vsel %vm335, %v304, 0
      %392 = vmatprep.subr.bf16.mxu0 %v390
      %393 = vmatpush1.bf16.msra.mxu0 %v387
      %394 = vmatprep.subr.bf16.mxu0 0
      %395 = vmatpush1.bf16.msra.mxu0 0
      %396 = vmatprep.subr.bf16.mxu0 0
      %397 = vmatpush1.bf16.msra.mxu0 0
      %398 = vmatprep.subr.bf16.mxu0 0
      %399 = vmatpush1.bf16.msra.mxu0 0
      %400 = vmatprep.subr.bf16.mxu0 0
      %401 = vmatpush1.bf16.msra.mxu0 0
      %402 = vmatprep.subr.bf16.mxu0 0
      %403 = vmatpush1.bf16.msra.mxu0 0
      %404 = vmatprep.subr.bf16.mxu0 0
      %405 = vmatpush1.bf16.msra.mxu0 0
      %406 = vmatprep.subr.bf16.mxu0 0
      %407 = vmatpush1.bf16.msra.mxu0 0
      %408 = vmatprep.subr.bf16.mxu0 0
      %409 = vmatpush1.bf16.msra.mxu0 0
      %410 = vmatprep.subr.bf16.mxu0 0
      %411 = vmatpush1.bf16.msra.mxu0 0
      %412 = vmatprep.subr.bf16.mxu0 0
      %413 = vmatpush1.bf16.msra.mxu0 0
      %414 = vmatprep.subr.bf16.mxu0 0
      %415 = vmatpush1.bf16.msra.mxu0 0
      %416 = vmatprep.subr.bf16.mxu0 0
      %417 = vmatpush1.bf16.msra.mxu0 0
      %418 = vmatprep.subr.bf16.mxu0 0
      %419 = vmatpush1.bf16.msra.mxu0 0
      %420 = vmatprep.subr.bf16.mxu0 0
      %421 = vmatpush1.bf16.msra.mxu0 0
      %422 = vmatprep.subr.bf16.mxu0 0
      %423 = vmatpush1.bf16.msra.mxu0 0
      %424 = vmatprep.mubr.bf16.mxu0 0
      %425 = vmatmul.mubr.bf16.gmra.mrb[0].mxu0 %v384
      %v426 = vpop.f32.mrb[0].mxu0
      %v427 = vadd.f32 %v377, %v426
      %v428 = vpop.f32.mrb[0].mxu0
      %v429 = vadd.f32 %v379, %v428
      %v430 = vpop.f32.mrb[0].mxu0
      %v431 = vpop.f32.mrb[0].mxu0
      %432 = vdwg.mxu0
      %433 = vrot.lane.b32.xlu0 %v274, 15
      %v434 = vpop.permute.xlu0 %433
      %435 = vrot.lane.b32.xlu0 %v275, 15
      %v436 = vpop.permute.xlu0 %435
      %vm437 = vcmp.lt.s32.totalorder %v284, 15
      %v438 = vsel %vm437, %v434, %v436
      %v439 = vsel %vm437, %v436, %v434
      %s440 = scalar_lea.vmem %s5, 4
      %v441 = vld [vmem:[%s440] sm:$0x3]
      %v443 = vlaneseq
      %v444 = vshrl.u32 %v443, 7
      %v445 = vsub.s32 0, %v444
      %v446 = vrot.slane %v441, %v445
      %v447 = vlaneseq
      %v448 = vshrl.u32 %v447, 7
      %v449 = vsub.s32 1, %v448
      %v450 = vrot.slane %v441, %v449
      %v453 = vmul.f32 %v439, %v446
      %v454 = vmul.f32 %v438, %v450
      %s455 = scalar_lea.vmem %s2, 8
      %v456 = vld [vmem:[%s455] sm:$0xf]
      %v457 = vpack.c.bf16 %v453, %v453
      %v458 = vpack.c.bf16 %v454, %v454
      %v460 = vsel %vm331, %v456, 0
      %v463 = vsel %vm335, %v457, 0
      %v466 = vsel %vm335, %v458, 0
      %468 = vmatprep.subr.bf16.mxu0 %v466
      %469 = vmatpush1.bf16.msra.mxu0 %v463
      %470 = vmatprep.subr.bf16.mxu0 0
      %471 = vmatpush1.bf16.msra.mxu0 0
      %472 = vmatprep.subr.bf16.mxu0 0
      %473 = vmatpush1.bf16.msra.mxu0 0
      %474 = vmatprep.subr.bf16.mxu0 0
      %475 = vmatpush1.bf16.msra.mxu0 0
      %476 = vmatprep.subr.bf16.mxu0 0
      %477 = vmatpush1.bf16.msra.mxu0 0
      %478 = vmatprep.subr.bf16.mxu0 0
      %479 = vmatpush1.bf16.msra.mxu0 0
      %480 = vmatprep.subr.bf16.mxu0 0
      %481 = vmatpush1.bf16.msra.mxu0 0
      %482 = vmatprep.subr.bf16.mxu0 0
      %483 = vmatpush1.bf16.msra.mxu0 0
      %484 = vmatprep.subr.bf16.mxu0 0
      %485 = vmatpush1.bf16.msra.mxu0 0
      %486 = vmatprep.subr.bf16.mxu0 0
      %487 = vmatpush1.bf16.msra.mxu0 0
      %488 = vmatprep.subr.bf16.mxu0 0
      %489 = vmatpush1.bf16.msra.mxu0 0
      %490 = vmatprep.subr.bf16.mxu0 0
      %491 = vmatpush1.bf16.msra.mxu0 0
      %492 = vmatprep.subr.bf16.mxu0 0
      %493 = vmatpush1.bf16.msra.mxu0 0
      %494 = vmatprep.subr.bf16.mxu0 0
      %495 = vmatpush1.bf16.msra.mxu0 0
      %496 = vmatprep.subr.bf16.mxu0 0
      %497 = vmatpush1.bf16.msra.mxu0 0
      %498 = vmatprep.subr.bf16.mxu0 0
      %499 = vmatpush1.bf16.msra.mxu0 0
      %500 = vmatprep.mubr.bf16.mxu0 0
      %501 = vmatmul.mubr.bf16.gmra.mrb[0].mxu0 %v460
      %v502 = vpop.f32.mrb[0].mxu0
      %v503 = vadd.f32 0.0, %v502
      %v504 = vpop.f32.mrb[0].mxu0
      %v505 = vadd.f32 0.0, %v504
      %v506 = vpop.f32.mrb[0].mxu0
      %v507 = vpop.f32.mrb[0].mxu0
      %508 = vdwg.mxu0
      %v509 = vadd.f32 %v427, %v503
      %v510 = vadd.f32 %v429, %v505
      %511 = vrot.lane.b32.xlu0 %v274, 1
      %v512 = vpop.permute.xlu0 %511
      %513 = vrot.lane.b32.xlu0 %v275, 1
      %v514 = vpop.permute.xlu0 %513
      %vm515 = vcmp.lt.s32.totalorder %v284, 1
      %v516 = vsel %vm515, %v512, %v514
      %v517 = vsel %vm515, %v514, %v512
      %s518 = scalar_lea.vmem %s5, 6
      %v519 = vld [vmem:[%s518] sm:$0x3]
      %v521 = vlaneseq
      %v522 = vshrl.u32 %v521, 7
      %v523 = vsub.s32 0, %v522
      %v524 = vrot.slane %v519, %v523
      %v525 = vlaneseq
      %v526 = vshrl.u32 %v525, 7
      %v527 = vsub.s32 1, %v526
      %v528 = vrot.slane %v519, %v527
      %v531 = vmul.f32 %v517, %v524
      %v532 = vmul.f32 %v516, %v528
      %s533 = scalar_lea.vmem %s2, 12
      %v534 = vld [vmem:[%s533] sm:$0xf]
      %v535 = vpack.c.bf16 %v531, %v531
      %v536 = vpack.c.bf16 %v532, %v532
      %v538 = vsel %vm331, %v534, 0
      %v541 = vsel %vm335, %v535, 0
      %v544 = vsel %vm335, %v536, 0
      %546 = vmatprep.subr.bf16.mxu0 %v544
      %547 = vmatpush1.bf16.msra.mxu0 %v541
      %548 = vmatprep.subr.bf16.mxu0 0
      %549 = vmatpush1.bf16.msra.mxu0 0
      %550 = vmatprep.subr.bf16.mxu0 0
      %551 = vmatpush1.bf16.msra.mxu0 0
      %552 = vmatprep.subr.bf16.mxu0 0
      %553 = vmatpush1.bf16.msra.mxu0 0
      %554 = vmatprep.subr.bf16.mxu0 0
      %555 = vmatpush1.bf16.msra.mxu0 0
      %556 = vmatprep.subr.bf16.mxu0 0
      %557 = vmatpush1.bf16.msra.mxu0 0
      %558 = vmatprep.subr.bf16.mxu0 0
      %559 = vmatpush1.bf16.msra.mxu0 0
      %560 = vmatprep.subr.bf16.mxu0 0
      %561 = vmatpush1.bf16.msra.mxu0 0
      %562 = vmatprep.subr.bf16.mxu0 0
      %563 = vmatpush1.bf16.msra.mxu0 0
      %564 = vmatprep.subr.bf16.mxu0 0
      %565 = vmatpush1.bf16.msra.mxu0 0
      %566 = vmatprep.subr.bf16.mxu0 0
      %567 = vmatpush1.bf16.msra.mxu0 0
      %568 = vmatprep.subr.bf16.mxu0 0
      %569 = vmatpush1.bf16.msra.mxu0 0
      %570 = vmatprep.subr.bf16.mxu0 0
      %571 = vmatpush1.bf16.msra.mxu0 0
      %572 = vmatprep.subr.bf16.mxu0 0
      %573 = vmatpush1.bf16.msra.mxu0 0
      %574 = vmatprep.subr.bf16.mxu0 0
      %575 = vmatpush1.bf16.msra.mxu0 0
      %576 = vmatprep.subr.bf16.mxu0 0
      %577 = vmatpush1.bf16.msra.mxu0 0
      %578 = vmatprep.mubr.bf16.mxu0 0
      %579 = vmatmul.mubr.bf16.gmra.mrb[0].mxu0 %v538
      %v580 = vpop.f32.mrb[0].mxu0
      %v581 = vadd.f32 0.0, %v580
      %v582 = vpop.f32.mrb[0].mxu0
      %v583 = vadd.f32 0.0, %v582
      %v584 = vpop.f32.mrb[0].mxu0
      %v585 = vpop.f32.mrb[0].mxu0
      %586 = vdwg.mxu0
      %v587 = vadd.f32 %v509, %v581
      %v588 = vadd.f32 %v510, %v583
      %s589 = scalar_lea.vmem %s2, 16
      %v590 = vld [vmem:[%s589] sm:$0xf]
      %v592 = vunpack.c.l.b16 %v273
      %v593 = vunpack.c.h.b16 %v273
      %v594 = vpack.c.b16 %v592, %v592
      %v595 = vpack.c.b16 %v593, %v593
      %v597 = vsel %vm331, %v590, 0
      %v600 = vsel %vm335, %v594, 0
      %v603 = vsel %vm335, %v595, 0
      %605 = vmatprep.subr.bf16.mxu0 %v603
      %606 = vmatpush1.bf16.msra.mxu0 %v600
      %607 = vmatprep.subr.bf16.mxu0 0
      %608 = vmatpush1.bf16.msra.mxu0 0
      %609 = vmatprep.subr.bf16.mxu0 0
      %610 = vmatpush1.bf16.msra.mxu0 0
      %611 = vmatprep.subr.bf16.mxu0 0
      %612 = vmatpush1.bf16.msra.mxu0 0
      %613 = vmatprep.subr.bf16.mxu0 0
      %614 = vmatpush1.bf16.msra.mxu0 0
      %615 = vmatprep.subr.bf16.mxu0 0
      %616 = vmatpush1.bf16.msra.mxu0 0
      %617 = vmatprep.subr.bf16.mxu0 0
      %618 = vmatpush1.bf16.msra.mxu0 0
      %619 = vmatprep.subr.bf16.mxu0 0
      %620 = vmatpush1.bf16.msra.mxu0 0
      %621 = vmatprep.subr.bf16.mxu0 0
      %622 = vmatpush1.bf16.msra.mxu0 0
      %623 = vmatprep.subr.bf16.mxu0 0
      %624 = vmatpush1.bf16.msra.mxu0 0
      %625 = vmatprep.subr.bf16.mxu0 0
      %626 = vmatpush1.bf16.msra.mxu0 0
      %627 = vmatprep.subr.bf16.mxu0 0
      %628 = vmatpush1.bf16.msra.mxu0 0
      %629 = vmatprep.subr.bf16.mxu0 0
      %630 = vmatpush1.bf16.msra.mxu0 0
      %631 = vmatprep.subr.bf16.mxu0 0
      %632 = vmatpush1.bf16.msra.mxu0 0
      %633 = vmatprep.subr.bf16.mxu0 0
      %634 = vmatpush1.bf16.msra.mxu0 0
      %635 = vmatprep.subr.bf16.mxu0 0
      %636 = vmatpush1.bf16.msra.mxu0 0
      %637 = vmatprep.mubr.bf16.mxu0 0
      %638 = vmatmul.mubr.bf16.gmra.mrb[0].mxu0 %v597
      %v639 = vpop.f32.mrb[0].mxu0
      %v640 = vadd.f32 0.0, %v639
      %v641 = vpop.f32.mrb[0].mxu0
      %v642 = vadd.f32 0.0, %v641
      %v643 = vpop.f32.mrb[0].mxu0
      %v644 = vpop.f32.mrb[0].mxu0
      %645 = vdwg.mxu0
      %v646 = vadd.f32 %v587, %v640
      %v647 = vadd.f32 %v588, %v642
      %648 = vrot.lane.b32.xlu0 %v274, 127
      %v649 = vpop.permute.xlu0 %648
      %650 = vrot.lane.b32.xlu0 %v275, 127
      %v651 = vpop.permute.xlu0 %650
      %vm652 = vcmp.lt.s32.totalorder %v284, 127
      %v653 = vsel %vm652, %v649, %v651
      %v654 = vsel %vm652, %v651, %v649
      %s655 = scalar_lea.vmem %s5, 10
      %v656 = vld [vmem:[%s655] sm:$0x3]
      %v658 = vlaneseq
      %v659 = vshrl.u32 %v658, 7
      %v660 = vsub.s32 0, %v659
      %v661 = vrot.slane %v656, %v660
      %v662 = vlaneseq
      %v663 = vshrl.u32 %v662, 7
      %v664 = vsub.s32 1, %v663
      %v665 = vrot.slane %v656, %v664
      %v668 = vmul.f32 %v653, %v661
      %v669 = vmul.f32 %v654, %v665
      %s670 = scalar_lea.vmem %s2, 20
      %v671 = vld [vmem:[%s670] sm:$0xf]
      %v672 = vpack.c.bf16 %v668, %v668
      %v673 = vpack.c.bf16 %v669, %v669
      %v675 = vsel %vm331, %v671, 0
      %v678 = vsel %vm335, %v672, 0
      %v681 = vsel %vm335, %v673, 0
      %683 = vmatprep.subr.bf16.mxu0 %v681
      %684 = vmatpush1.bf16.msra.mxu0 %v678
      %685 = vmatprep.subr.bf16.mxu0 0
      %686 = vmatpush1.bf16.msra.mxu0 0
      %687 = vmatprep.subr.bf16.mxu0 0
      %688 = vmatpush1.bf16.msra.mxu0 0
      %689 = vmatprep.subr.bf16.mxu0 0
      %690 = vmatpush1.bf16.msra.mxu0 0
      %691 = vmatprep.subr.bf16.mxu0 0
      %692 = vmatpush1.bf16.msra.mxu0 0
      %693 = vmatprep.subr.bf16.mxu0 0
      %694 = vmatpush1.bf16.msra.mxu0 0
      %695 = vmatprep.subr.bf16.mxu0 0
      %696 = vmatpush1.bf16.msra.mxu0 0
      %697 = vmatprep.subr.bf16.mxu0 0
      %698 = vmatpush1.bf16.msra.mxu0 0
      %699 = vmatprep.subr.bf16.mxu0 0
      %700 = vmatpush1.bf16.msra.mxu0 0
      %701 = vmatprep.subr.bf16.mxu0 0
      %702 = vmatpush1.bf16.msra.mxu0 0
      %703 = vmatprep.subr.bf16.mxu0 0
      %704 = vmatpush1.bf16.msra.mxu0 0
      %705 = vmatprep.subr.bf16.mxu0 0
      %706 = vmatpush1.bf16.msra.mxu0 0
      %707 = vmatprep.subr.bf16.mxu0 0
      %708 = vmatpush1.bf16.msra.mxu0 0
      %709 = vmatprep.subr.bf16.mxu0 0
      %710 = vmatpush1.bf16.msra.mxu0 0
      %711 = vmatprep.subr.bf16.mxu0 0
      %712 = vmatpush1.bf16.msra.mxu0 0
      %713 = vmatprep.subr.bf16.mxu0 0
      %714 = vmatpush1.bf16.msra.mxu0 0
      %715 = vmatprep.mubr.bf16.mxu0 0
      %716 = vmatmul.mubr.bf16.gmra.mrb[0].mxu0 %v675
      %v717 = vpop.f32.mrb[0].mxu0
      %v718 = vadd.f32 0.0, %v717
      %v719 = vpop.f32.mrb[0].mxu0
      %v720 = vadd.f32 0.0, %v719
      %v721 = vpop.f32.mrb[0].mxu0
      %v722 = vpop.f32.mrb[0].mxu0
      %723 = vdwg.mxu0
      %v724 = vadd.f32 %v646, %v718
      %v725 = vadd.f32 %v647, %v720
      %726 = vrot.lane.b32.xlu0 %v274, 113
      %v727 = vpop.permute.xlu0 %726
      %728 = vrot.lane.b32.xlu0 %v275, 113
      %v729 = vpop.permute.xlu0 %728
      %vm730 = vcmp.lt.s32.totalorder %v284, 113
      %v731 = vsel %vm730, %v727, %v729
      %v732 = vsel %vm730, %v729, %v727
      %s733 = scalar_lea.vmem %s5, 12
      %v734 = vld [vmem:[%s733] sm:$0x3]
      %v736 = vlaneseq
      %v737 = vshrl.u32 %v736, 7
      %v738 = vsub.s32 0, %v737
      %v739 = vrot.slane %v734, %v738
      %v740 = vlaneseq
      %v741 = vshrl.u32 %v740, 7
      %v742 = vsub.s32 1, %v741
      %v743 = vrot.slane %v734, %v742
      %v746 = vmul.f32 %v731, %v739
      %v747 = vmul.f32 %v732, %v743
      %s748 = scalar_lea.vmem %s2, 24
      %v749 = vld [vmem:[%s748] sm:$0xf]
      %v750 = vpack.c.bf16 %v746, %v746
      %v751 = vpack.c.bf16 %v747, %v747
      %v753 = vsel %vm331, %v749, 0
      %v756 = vsel %vm335, %v750, 0
      %v759 = vsel %vm335, %v751, 0
      %761 = vmatprep.subr.bf16.mxu0 %v759
      %762 = vmatpush1.bf16.msra.mxu0 %v756
      %763 = vmatprep.subr.bf16.mxu0 0
      %764 = vmatpush1.bf16.msra.mxu0 0
      %765 = vmatprep.subr.bf16.mxu0 0
      %766 = vmatpush1.bf16.msra.mxu0 0
      %767 = vmatprep.subr.bf16.mxu0 0
      %768 = vmatpush1.bf16.msra.mxu0 0
      %769 = vmatprep.subr.bf16.mxu0 0
      %770 = vmatpush1.bf16.msra.mxu0 0
      %771 = vmatprep.subr.bf16.mxu0 0
      %772 = vmatpush1.bf16.msra.mxu0 0
      %773 = vmatprep.subr.bf16.mxu0 0
      %774 = vmatpush1.bf16.msra.mxu0 0
      %775 = vmatprep.subr.bf16.mxu0 0
      %776 = vmatpush1.bf16.msra.mxu0 0
      %777 = vmatprep.subr.bf16.mxu0 0
      %778 = vmatpush1.bf16.msra.mxu0 0
      %779 = vmatprep.subr.bf16.mxu0 0
      %780 = vmatpush1.bf16.msra.mxu0 0
      %781 = vmatprep.subr.bf16.mxu0 0
      %782 = vmatpush1.bf16.msra.mxu0 0
      %783 = vmatprep.subr.bf16.mxu0 0
      %784 = vmatpush1.bf16.msra.mxu0 0
      %785 = vmatprep.subr.bf16.mxu0 0
      %786 = vmatpush1.bf16.msra.mxu0 0
      %787 = vmatprep.subr.bf16.mxu0 0
      %788 = vmatpush1.bf16.msra.mxu0 0
      %789 = vmatprep.subr.bf16.mxu0 0
      %790 = vmatpush1.bf16.msra.mxu0 0
      %791 = vmatprep.subr.bf16.mxu0 0
      %792 = vmatpush1.bf16.msra.mxu0 0
      %793 = vmatprep.mubr.bf16.mxu0 0
      %794 = vmatmul.mubr.bf16.gmra.mrb[0].mxu0 %v753
      %v795 = vpop.f32.mrb[0].mxu0
      %v796 = vadd.f32 0.0, %v795
      %v797 = vpop.f32.mrb[0].mxu0
      %v798 = vadd.f32 0.0, %v797
      %v799 = vpop.f32.mrb[0].mxu0
      %v800 = vpop.f32.mrb[0].mxu0
      %801 = vdwg.mxu0
      %v802 = vadd.f32 %v724, %v796
      %v803 = vadd.f32 %v725, %v798
      %804 = vrot.lane.b32.xlu0 %v274, 112
      %v805 = vpop.permute.xlu0 %804
      %806 = vrot.lane.b32.xlu0 %v275, 112
      %v807 = vpop.permute.xlu0 %806
      %vm808 = vcmp.lt.s32.totalorder %v284, 112
      %v809 = vsel %vm808, %v805, %v807
      %v810 = vsel %vm808, %v807, %v805
      %s811 = scalar_lea.vmem %s5, 14
      %v812 = vld [vmem:[%s811] sm:$0x3]
      %v814 = vlaneseq
      %v815 = vshrl.u32 %v814, 7
      %v816 = vsub.s32 0, %v815
      %v817 = vrot.slane %v812, %v816
      %v818 = vlaneseq
      %v819 = vshrl.u32 %v818, 7
      %v820 = vsub.s32 1, %v819
      %v821 = vrot.slane %v812, %v820
      %v824 = vmul.f32 %v809, %v817
      %v825 = vmul.f32 %v810, %v821
      %s826 = scalar_lea.vmem %s2, 28
      %v827 = vld [vmem:[%s826] sm:$0xf]
      %v828 = vpack.c.bf16 %v824, %v824
      %v829 = vpack.c.bf16 %v825, %v825
      %v831 = vsel %vm331, %v827, 0
      %v834 = vsel %vm335, %v828, 0
      %v837 = vsel %vm335, %v829, 0
      %839 = vmatprep.subr.bf16.mxu0 %v837
      %840 = vmatpush1.bf16.msra.mxu0 %v834
      %841 = vmatprep.subr.bf16.mxu0 0
      %842 = vmatpush1.bf16.msra.mxu0 0
      %843 = vmatprep.subr.bf16.mxu0 0
      %844 = vmatpush1.bf16.msra.mxu0 0
      %845 = vmatprep.subr.bf16.mxu0 0
      %846 = vmatpush1.bf16.msra.mxu0 0
      %847 = vmatprep.subr.bf16.mxu0 0
      %848 = vmatpush1.bf16.msra.mxu0 0
      %849 = vmatprep.subr.bf16.mxu0 0
      %850 = vmatpush1.bf16.msra.mxu0 0
      %851 = vmatprep.subr.bf16.mxu0 0
      %852 = vmatpush1.bf16.msra.mxu0 0
      %853 = vmatprep.subr.bf16.mxu0 0
      %854 = vmatpush1.bf16.msra.mxu0 0
      %855 = vmatprep.subr.bf16.mxu0 0
      %856 = vmatpush1.bf16.msra.mxu0 0
      %857 = vmatprep.subr.bf16.mxu0 0
      %858 = vmatpush1.bf16.msra.mxu0 0
      %859 = vmatprep.subr.bf16.mxu0 0
      %860 = vmatpush1.bf16.msra.mxu0 0
      %861 = vmatprep.subr.bf16.mxu0 0
      %862 = vmatpush1.bf16.msra.mxu0 0
      %863 = vmatprep.subr.bf16.mxu0 0
      %864 = vmatpush1.bf16.msra.mxu0 0
      %865 = vmatprep.subr.bf16.mxu0 0
      %866 = vmatpush1.bf16.msra.mxu0 0
      %867 = vmatprep.subr.bf16.mxu0 0
      %868 = vmatpush1.bf16.msra.mxu0 0
      %869 = vmatprep.subr.bf16.mxu0 0
      %870 = vmatpush1.bf16.msra.mxu0 0
      %871 = vmatprep.mubr.bf16.mxu0 0
      %872 = vmatmul.mubr.bf16.gmra.mrb[0].mxu0 %v831
      %v873 = vpop.f32.mrb[0].mxu0
      %v874 = vadd.f32 0.0, %v873
      %v875 = vpop.f32.mrb[0].mxu0
      %v876 = vadd.f32 0.0, %v875
      %v877 = vpop.f32.mrb[0].mxu0
      %v878 = vpop.f32.mrb[0].mxu0
      %879 = vdwg.mxu0
      %v880 = vadd.f32 %v802, %v874
      %v881 = vadd.f32 %v803, %v876
      %882 = vrot.lane.b32.xlu0 %v274, 111
      %v883 = vpop.permute.xlu0 %882
      %884 = vrot.lane.b32.xlu0 %v275, 111
      %v885 = vpop.permute.xlu0 %884
      %vm886 = vcmp.lt.s32.totalorder %v284, 111
      %v887 = vsel %vm886, %v883, %v885
      %v888 = vsel %vm886, %v885, %v883
      %s889 = scalar_lea.vmem %s5, 16
      %v890 = vld [vmem:[%s889] sm:$0x3]
      %v892 = vlaneseq
      %v893 = vshrl.u32 %v892, 7
      %v894 = vsub.s32 0, %v893
      %v895 = vrot.slane %v890, %v894
      %v896 = vlaneseq
      %v897 = vshrl.u32 %v896, 7
      %v898 = vsub.s32 1, %v897
      %v899 = vrot.slane %v890, %v898
      %v902 = vmul.f32 %v887, %v895
      %v903 = vmul.f32 %v888, %v899
      %s904 = scalar_lea.vmem %s2, 32
      %v905 = vld [vmem:[%s904] sm:$0xf]
      %v906 = vpack.c.bf16 %v902, %v902
      %v907 = vpack.c.bf16 %v903, %v903
      %v909 = vsel %vm331, %v905, 0
      %v912 = vsel %vm335, %v906, 0
      %v915 = vsel %vm335, %v907, 0
      %917 = vmatprep.subr.bf16.mxu0 %v915
      %918 = vmatpush1.bf16.msra.mxu0 %v912
      %919 = vmatprep.subr.bf16.mxu0 0
      %920 = vmatpush1.bf16.msra.mxu0 0
      %921 = vmatprep.subr.bf16.mxu0 0
      %922 = vmatpush1.bf16.msra.mxu0 0
      %923 = vmatprep.subr.bf16.mxu0 0
      %924 = vmatpush1.bf16.msra.mxu0 0
      %925 = vmatprep.subr.bf16.mxu0 0
      %926 = vmatpush1.bf16.msra.mxu0 0
      %927 = vmatprep.subr.bf16.mxu0 0
      %928 = vmatpush1.bf16.msra.mxu0 0
      %929 = vmatprep.subr.bf16.mxu0 0
      %930 = vmatpush1.bf16.msra.mxu0 0
      %931 = vmatprep.subr.bf16.mxu0 0
      %932 = vmatpush1.bf16.msra.mxu0 0
      %933 = vmatprep.subr.bf16.mxu0 0
      %934 = vmatpush1.bf16.msra.mxu0 0
      %935 = vmatprep.subr.bf16.mxu0 0
      %936 = vmatpush1.bf16.msra.mxu0 0
      %937 = vmatprep.subr.bf16.mxu0 0
      %938 = vmatpush1.bf16.msra.mxu0 0
      %939 = vmatprep.subr.bf16.mxu0 0
      %940 = vmatpush1.bf16.msra.mxu0 0
      %941 = vmatprep.subr.bf16.mxu0 0
      %942 = vmatpush1.bf16.msra.mxu0 0
      %943 = vmatprep.subr.bf16.mxu0 0
      %944 = vmatpush1.bf16.msra.mxu0 0
      %945 = vmatprep.subr.bf16.mxu0 0
      %946 = vmatpush1.bf16.msra.mxu0 0
      %947 = vmatprep.subr.bf16.mxu0 0
      %948 = vmatpush1.bf16.msra.mxu0 0
      %949 = vmatprep.mubr.bf16.mxu0 0
      %950 = vmatmul.mubr.bf16.gmra.mrb[0].mxu0 %v909
      %v951 = vpop.f32.mrb[0].mxu0
      %v952 = vadd.f32 0.0, %v951
      %v953 = vpop.f32.mrb[0].mxu0
      %v954 = vadd.f32 0.0, %v953
      %v955 = vpop.f32.mrb[0].mxu0
      %v956 = vpop.f32.mrb[0].mxu0
      %957 = vdwg.mxu0
      %v958 = vadd.f32 %v880, %v952
      %v959 = vadd.f32 %v881, %v954
      %960 = vrot.lane.b32.xlu0 %v277, 17
      %v961 = vpop.permute.xlu0 %960
      %962 = vrot.lane.b32.xlu0 %v278, 17
      %v963 = vpop.permute.xlu0 %962
      %v964 = vsel %vm285, %v961, %v963
      %v965 = vsel %vm285, %v963, %v961
      %v966 = vmul.f32 %v965, %v293
      %v967 = vmul.f32 %v964, %v297
      %v968 = vld [vmem:[%s3] sm:$0xf]
      %v969 = vpack.c.bf16 %v966, %v966
      %v970 = vpack.c.bf16 %v967, %v967
      %v972 = vsel %vm331, %v968, 0
      %v975 = vsel %vm335, %v969, 0
      %v978 = vsel %vm335, %v970, 0
      %980 = vmatprep.subr.bf16.mxu0 %v978
      %981 = vmatpush1.bf16.msra.mxu0 %v975
      %982 = vmatprep.subr.bf16.mxu0 0
      %983 = vmatpush1.bf16.msra.mxu0 0
      %984 = vmatprep.subr.bf16.mxu0 0
      %985 = vmatpush1.bf16.msra.mxu0 0
      %986 = vmatprep.subr.bf16.mxu0 0
      %987 = vmatpush1.bf16.msra.mxu0 0
      %988 = vmatprep.subr.bf16.mxu0 0
      %989 = vmatpush1.bf16.msra.mxu0 0
      %990 = vmatprep.subr.bf16.mxu0 0
      %991 = vmatpush1.bf16.msra.mxu0 0
      %992 = vmatprep.subr.bf16.mxu0 0
      %993 = vmatpush1.bf16.msra.mxu0 0
      %994 = vmatprep.subr.bf16.mxu0 0
      %995 = vmatpush1.bf16.msra.mxu0 0
      %996 = vmatprep.subr.bf16.mxu0 0
      %997 = vmatpush1.bf16.msra.mxu0 0
      %998 = vmatprep.subr.bf16.mxu0 0
      %999 = vmatpush1.bf16.msra.mxu0 0
      %1000 = vmatprep.subr.bf16.mxu0 0
      %1001 = vmatpush1.bf16.msra.mxu0 0
      %1002 = vmatprep.subr.bf16.mxu0 0
      %1003 = vmatpush1.bf16.msra.mxu0 0
      %1004 = vmatprep.subr.bf16.mxu0 0
      %1005 = vmatpush1.bf16.msra.mxu0 0
      %1006 = vmatprep.subr.bf16.mxu0 0
      %1007 = vmatpush1.bf16.msra.mxu0 0
      %1008 = vmatprep.subr.bf16.mxu0 0
      %1009 = vmatpush1.bf16.msra.mxu0 0
      %1010 = vmatprep.subr.bf16.mxu0 0
      %1011 = vmatpush1.bf16.msra.mxu0 0
      %1012 = vmatprep.mubr.bf16.mxu0 0
      %1013 = vmatmul.mubr.bf16.gmra.mrb[0].mxu0 %v972
      %v1014 = vpop.f32.mrb[0].mxu0
      %v1015 = vadd.f32 0.0, %v1014
      %v1016 = vpop.f32.mrb[0].mxu0
      %v1017 = vadd.f32 0.0, %v1016
      %v1018 = vpop.f32.mrb[0].mxu0
      %v1019 = vpop.f32.mrb[0].mxu0
      %1020 = vdwg.mxu0
      %v1021 = vadd.f32 %v958, %v1015
      %v1022 = vadd.f32 %v959, %v1017
      %1023 = vrot.lane.b32.xlu0 %v277, 16
      %v1024 = vpop.permute.xlu0 %1023
      %1025 = vrot.lane.b32.xlu0 %v278, 16
      %v1026 = vpop.permute.xlu0 %1025
      %v1027 = vsel %vm309, %v1024, %v1026
      %v1028 = vsel %vm309, %v1026, %v1024
      %v1029 = vmul.f32 %v1028, %v318
      %v1030 = vmul.f32 %v1027, %v322
      %s1031 = scalar_lea.vmem %s3, 4
      %v1032 = vld [vmem:[%s1031] sm:$0xf]
      %v1033 = vpack.c.bf16 %v1029, %v1029
      %v1034 = vpack.c.bf16 %v1030, %v1030
      %v1036 = vsel %vm331, %v1032, 0
      %v1039 = vsel %vm335, %v1033, 0
      %v1042 = vsel %vm335, %v1034, 0
      %1044 = vmatprep.subr.bf16.mxu0 %v1042
      %1045 = vmatpush1.bf16.msra.mxu0 %v1039
      %1046 = vmatprep.subr.bf16.mxu0 0
      %1047 = vmatpush1.bf16.msra.mxu0 0
      %1048 = vmatprep.subr.bf16.mxu0 0
      %1049 = vmatpush1.bf16.msra.mxu0 0
      %1050 = vmatprep.subr.bf16.mxu0 0
      %1051 = vmatpush1.bf16.msra.mxu0 0
      %1052 = vmatprep.subr.bf16.mxu0 0
      %1053 = vmatpush1.bf16.msra.mxu0 0
      %1054 = vmatprep.subr.bf16.mxu0 0
      %1055 = vmatpush1.bf16.msra.mxu0 0
      %1056 = vmatprep.subr.bf16.mxu0 0
      %1057 = vmatpush1.bf16.msra.mxu0 0
      %1058 = vmatprep.subr.bf16.mxu0 0
      %1059 = vmatpush1.bf16.msra.mxu0 0
      %1060 = vmatprep.subr.bf16.mxu0 0
      %1061 = vmatpush1.bf16.msra.mxu0 0
      %1062 = vmatprep.subr.bf16.mxu0 0
      %1063 = vmatpush1.bf16.msra.mxu0 0
      %1064 = vmatprep.subr.bf16.mxu0 0
      %1065 = vmatpush1.bf16.msra.mxu0 0
      %1066 = vmatprep.subr.bf16.mxu0 0
      %1067 = vmatpush1.bf16.msra.mxu0 0
      %1068 = vmatprep.subr.bf16.mxu0 0
      %1069 = vmatpush1.bf16.msra.mxu0 0
      %1070 = vmatprep.subr.bf16.mxu0 0
      %1071 = vmatpush1.bf16.msra.mxu0 0
      %1072 = vmatprep.subr.bf16.mxu0 0
      %1073 = vmatpush1.bf16.msra.mxu0 0
      %1074 = vmatprep.subr.bf16.mxu0 0
      %1075 = vmatpush1.bf16.msra.mxu0 0
      %1076 = vmatprep.mubr.bf16.mxu0 0
      %1077 = vmatmul.mubr.bf16.gmra.mrb[0].mxu0 %v1036
      %v1078 = vpop.f32.mrb[0].mxu0
      %v1079 = vadd.f32 0.0, %v1078
      %v1080 = vpop.f32.mrb[0].mxu0
      %v1081 = vadd.f32 0.0, %v1080
      %v1082 = vpop.f32.mrb[0].mxu0
      %v1083 = vpop.f32.mrb[0].mxu0
      %1084 = vdwg.mxu0
      %v1085 = vadd.f32 %v1021, %v1079
      %v1086 = vadd.f32 %v1022, %v1081
      %1087 = vrot.lane.b32.xlu0 %v277, 15
      %v1088 = vpop.permute.xlu0 %1087
      %1089 = vrot.lane.b32.xlu0 %v278, 15
      %v1090 = vpop.permute.xlu0 %1089
      %v1091 = vsel %vm437, %v1088, %v1090
      %v1092 = vsel %vm437, %v1090, %v1088
      %v1093 = vmul.f32 %v1092, %v446
      %v1094 = vmul.f32 %v1091, %v450
      %s1095 = scalar_lea.vmem %s3, 8
      %v1096 = vld [vmem:[%s1095] sm:$0xf]
      %v1097 = vpack.c.bf16 %v1093, %v1093
      %v1098 = vpack.c.bf16 %v1094, %v1094
      %v1100 = vsel %vm331, %v1096, 0
      %v1103 = vsel %vm335, %v1097, 0
      %v1106 = vsel %vm335, %v1098, 0
      %1108 = vmatprep.subr.bf16.mxu0 %v1106
      %1109 = vmatpush1.bf16.msra.mxu0 %v1103
      %1110 = vmatprep.subr.bf16.mxu0 0
      %1111 = vmatpush1.bf16.msra.mxu0 0
      %1112 = vmatprep.subr.bf16.mxu0 0
      %1113 = vmatpush1.bf16.msra.mxu0 0
      %1114 = vmatprep.subr.bf16.mxu0 0
      %1115 = vmatpush1.bf16.msra.mxu0 0
      %1116 = vmatprep.subr.bf16.mxu0 0
      %1117 = vmatpush1.bf16.msra.mxu0 0
      %1118 = vmatprep.subr.bf16.mxu0 0
      %1119 = vmatpush1.bf16.msra.mxu0 0
      %1120 = vmatprep.subr.bf16.mxu0 0
      %1121 = vmatpush1.bf16.msra.mxu0 0
      %1122 = vmatprep.subr.bf16.mxu0 0
      %1123 = vmatpush1.bf16.msra.mxu0 0
      %1124 = vmatprep.subr.bf16.mxu0 0
      %1125 = vmatpush1.bf16.msra.mxu0 0
      %1126 = vmatprep.subr.bf16.mxu0 0
      %1127 = vmatpush1.bf16.msra.mxu0 0
      %1128 = vmatprep.subr.bf16.mxu0 0
      %1129 = vmatpush1.bf16.msra.mxu0 0
      %1130 = vmatprep.subr.bf16.mxu0 0
      %1131 = vmatpush1.bf16.msra.mxu0 0
      %1132 = vmatprep.subr.bf16.mxu0 0
      %1133 = vmatpush1.bf16.msra.mxu0 0
      %1134 = vmatprep.subr.bf16.mxu0 0
      %1135 = vmatpush1.bf16.msra.mxu0 0
      %1136 = vmatprep.subr.bf16.mxu0 0
      %1137 = vmatpush1.bf16.msra.mxu0 0
      %1138 = vmatprep.subr.bf16.mxu0 0
      %1139 = vmatpush1.bf16.msra.mxu0 0
      %1140 = vmatprep.mubr.bf16.mxu0 0
      %1141 = vmatmul.mubr.bf16.gmra.mrb[0].mxu0 %v1100
      %v1142 = vpop.f32.mrb[0].mxu0
      %v1143 = vadd.f32 0.0, %v1142
      %v1144 = vpop.f32.mrb[0].mxu0
      %v1145 = vadd.f32 0.0, %v1144
      %v1146 = vpop.f32.mrb[0].mxu0
      %v1147 = vpop.f32.mrb[0].mxu0
      %1148 = vdwg.mxu0
      %v1149 = vadd.f32 %v1085, %v1143
      %v1150 = vadd.f32 %v1086, %v1145
      %1151 = vrot.lane.b32.xlu0 %v277, 1
      %v1152 = vpop.permute.xlu0 %1151
      %1153 = vrot.lane.b32.xlu0 %v278, 1
      %v1154 = vpop.permute.xlu0 %1153
      %v1155 = vsel %vm515, %v1152, %v1154
      %v1156 = vsel %vm515, %v1154, %v1152
      %v1157 = vmul.f32 %v1156, %v524
      %v1158 = vmul.f32 %v1155, %v528
      %s1159 = scalar_lea.vmem %s3, 12
      %v1160 = vld [vmem:[%s1159] sm:$0xf]
      %v1161 = vpack.c.bf16 %v1157, %v1157
      %v1162 = vpack.c.bf16 %v1158, %v1158
      %v1164 = vsel %vm331, %v1160, 0
      %v1167 = vsel %vm335, %v1161, 0
      %v1170 = vsel %vm335, %v1162, 0
      %1172 = vmatprep.subr.bf16.mxu0 %v1170
      %1173 = vmatpush1.bf16.msra.mxu0 %v1167
      %1174 = vmatprep.subr.bf16.mxu0 0
      %1175 = vmatpush1.bf16.msra.mxu0 0
      %1176 = vmatprep.subr.bf16.mxu0 0
      %1177 = vmatpush1.bf16.msra.mxu0 0
      %1178 = vmatprep.subr.bf16.mxu0 0
      %1179 = vmatpush1.bf16.msra.mxu0 0
      %1180 = vmatprep.subr.bf16.mxu0 0
      %1181 = vmatpush1.bf16.msra.mxu0 0
      %1182 = vmatprep.subr.bf16.mxu0 0
      %1183 = vmatpush1.bf16.msra.mxu0 0
      %1184 = vmatprep.subr.bf16.mxu0 0
      %1185 = vmatpush1.bf16.msra.mxu0 0
      %1186 = vmatprep.subr.bf16.mxu0 0
      %1187 = vmatpush1.bf16.msra.mxu0 0
      %1188 = vmatprep.subr.bf16.mxu0 0
      %1189 = vmatpush1.bf16.msra.mxu0 0
      %1190 = vmatprep.subr.bf16.mxu0 0
      %1191 = vmatpush1.bf16.msra.mxu0 0
      %1192 = vmatprep.subr.bf16.mxu0 0
      %1193 = vmatpush1.bf16.msra.mxu0 0
      %1194 = vmatprep.subr.bf16.mxu0 0
      %1195 = vmatpush1.bf16.msra.mxu0 0
      %1196 = vmatprep.subr.bf16.mxu0 0
      %1197 = vmatpush1.bf16.msra.mxu0 0
      %1198 = vmatprep.subr.bf16.mxu0 0
      %1199 = vmatpush1.bf16.msra.mxu0 0
      %1200 = vmatprep.subr.bf16.mxu0 0
      %1201 = vmatpush1.bf16.msra.mxu0 0
      %1202 = vmatprep.subr.bf16.mxu0 0
      %1203 = vmatpush1.bf16.msra.mxu0 0
      %1204 = vmatprep.mubr.bf16.mxu0 0
      %1205 = vmatmul.mubr.bf16.gmra.mrb[0].mxu0 %v1164
      %v1206 = vpop.f32.mrb[0].mxu0
      %v1207 = vadd.f32 0.0, %v1206
      %v1208 = vpop.f32.mrb[0].mxu0
      %v1209 = vadd.f32 0.0, %v1208
      %v1210 = vpop.f32.mrb[0].mxu0
      %v1211 = vpop.f32.mrb[0].mxu0
      %1212 = vdwg.mxu0
      %v1213 = vadd.f32 %v1149, %v1207
      %v1214 = vadd.f32 %v1150, %v1209
      %s1215 = scalar_lea.vmem %s3, 16
      %v1216 = vld [vmem:[%s1215] sm:$0xf]
      %v1218 = vunpack.c.l.b16 %v276
      %v1219 = vunpack.c.h.b16 %v276
      %v1220 = vpack.c.b16 %v1218, %v1218
      %v1221 = vpack.c.b16 %v1219, %v1219
      %v1223 = vsel %vm331, %v1216, 0
      %v1226 = vsel %vm335, %v1220, 0
      %v1229 = vsel %vm335, %v1221, 0
      %1231 = vmatprep.subr.bf16.mxu0 %v1229
      %1232 = vmatpush1.bf16.msra.mxu0 %v1226
      %1233 = vmatprep.subr.bf16.mxu0 0
      %1234 = vmatpush1.bf16.msra.mxu0 0
      %1235 = vmatprep.subr.bf16.mxu0 0
      %1236 = vmatpush1.bf16.msra.mxu0 0
      %1237 = vmatprep.subr.bf16.mxu0 0
      %1238 = vmatpush1.bf16.msra.mxu0 0
      %1239 = vmatprep.subr.bf16.mxu0 0
      %1240 = vmatpush1.bf16.msra.mxu0 0
      %1241 = vmatprep.subr.bf16.mxu0 0
      %1242 = vmatpush1.bf16.msra.mxu0 0
      %1243 = vmatprep.subr.bf16.mxu0 0
      %1244 = vmatpush1.bf16.msra.mxu0 0
      %1245 = vmatprep.subr.bf16.mxu0 0
      %1246 = vmatpush1.bf16.msra.mxu0 0
      %1247 = vmatprep.subr.bf16.mxu0 0
      %1248 = vmatpush1.bf16.msra.mxu0 0
      %1249 = vmatprep.subr.bf16.mxu0 0
      %1250 = vmatpush1.bf16.msra.mxu0 0
      %1251 = vmatprep.subr.bf16.mxu0 0
      %1252 = vmatpush1.bf16.msra.mxu0 0
      %1253 = vmatprep.subr.bf16.mxu0 0
      %1254 = vmatpush1.bf16.msra.mxu0 0
      %1255 = vmatprep.subr.bf16.mxu0 0
      %1256 = vmatpush1.bf16.msra.mxu0 0
      %1257 = vmatprep.subr.bf16.mxu0 0
      %1258 = vmatpush1.bf16.msra.mxu0 0
      %1259 = vmatprep.subr.bf16.mxu0 0
      %1260 = vmatpush1.bf16.msra.mxu0 0
      %1261 = vmatprep.subr.bf16.mxu0 0
      %1262 = vmatpush1.bf16.msra.mxu0 0
      %1263 = vmatprep.mubr.bf16.mxu0 0
      %1264 = vmatmul.mubr.bf16.gmra.mrb[0].mxu0 %v1223
      %v1265 = vpop.f32.mrb[0].mxu0
      %v1266 = vadd.f32 0.0, %v1265
      %v1267 = vpop.f32.mrb[0].mxu0
      %v1268 = vadd.f32 0.0, %v1267
      %v1269 = vpop.f32.mrb[0].mxu0
      %v1270 = vpop.f32.mrb[0].mxu0
      %1271 = vdwg.mxu0
      %v1272 = vadd.f32 %v1213, %v1266
      %v1273 = vadd.f32 %v1214, %v1268
      %1274 = vrot.lane.b32.xlu0 %v277, 127
      %v1275 = vpop.permute.xlu0 %1274
      %1276 = vrot.lane.b32.xlu0 %v278, 127
      %v1277 = vpop.permute.xlu0 %1276
      %v1278 = vsel %vm652, %v1275, %v1277
      %v1279 = vsel %vm652, %v1277, %v1275
      %v1280 = vmul.f32 %v1278, %v661
      %v1281 = vmul.f32 %v1279, %v665
      %s1282 = scalar_lea.vmem %s3, 20
      %v1283 = vld [vmem:[%s1282] sm:$0xf]
      %v1284 = vpack.c.bf16 %v1280, %v1280
      %v1285 = vpack.c.bf16 %v1281, %v1281
      %v1287 = vsel %vm331, %v1283, 0
      %v1290 = vsel %vm335, %v1284, 0
      %v1293 = vsel %vm335, %v1285, 0
      %1295 = vmatprep.subr.bf16.mxu0 %v1293
      %1296 = vmatpush1.bf16.msra.mxu0 %v1290
      %1297 = vmatprep.subr.bf16.mxu0 0
      %1298 = vmatpush1.bf16.msra.mxu0 0
      %1299 = vmatprep.subr.bf16.mxu0 0
      %1300 = vmatpush1.bf16.msra.mxu0 0
      %1301 = vmatprep.subr.bf16.mxu0 0
      %1302 = vmatpush1.bf16.msra.mxu0 0
      %1303 = vmatprep.subr.bf16.mxu0 0
      %1304 = vmatpush1.bf16.msra.mxu0 0
      %1305 = vmatprep.subr.bf16.mxu0 0
      %1306 = vmatpush1.bf16.msra.mxu0 0
      %1307 = vmatprep.subr.bf16.mxu0 0
      %1308 = vmatpush1.bf16.msra.mxu0 0
      %1309 = vmatprep.subr.bf16.mxu0 0
      %1310 = vmatpush1.bf16.msra.mxu0 0
      %1311 = vmatprep.subr.bf16.mxu0 0
      %1312 = vmatpush1.bf16.msra.mxu0 0
      %1313 = vmatprep.subr.bf16.mxu0 0
      %1314 = vmatpush1.bf16.msra.mxu0 0
      %1315 = vmatprep.subr.bf16.mxu0 0
      %1316 = vmatpush1.bf16.msra.mxu0 0
      %1317 = vmatprep.subr.bf16.mxu0 0
      %1318 = vmatpush1.bf16.msra.mxu0 0
      %1319 = vmatprep.subr.bf16.mxu0 0
      %1320 = vmatpush1.bf16.msra.mxu0 0
      %1321 = vmatprep.subr.bf16.mxu0 0
      %1322 = vmatpush1.bf16.msra.mxu0 0
      %1323 = vmatprep.subr.bf16.mxu0 0
      %1324 = vmatpush1.bf16.msra.mxu0 0
      %1325 = vmatprep.subr.bf16.mxu0 0
      %1326 = vmatpush1.bf16.msra.mxu0 0
      %1327 = vmatprep.mubr.bf16.mxu0 0
      %1328 = vmatmul.mubr.bf16.gmra.mrb[0].mxu0 %v1287
      %v1329 = vpop.f32.mrb[0].mxu0
      %v1330 = vadd.f32 0.0, %v1329
      %v1331 = vpop.f32.mrb[0].mxu0
      %v1332 = vadd.f32 0.0, %v1331
      %v1333 = vpop.f32.mrb[0].mxu0
      %v1334 = vpop.f32.mrb[0].mxu0
      %1335 = vdwg.mxu0
      %v1336 = vadd.f32 %v1272, %v1330
      %v1337 = vadd.f32 %v1273, %v1332
      %1338 = vrot.lane.b32.xlu0 %v277, 113
      %v1339 = vpop.permute.xlu0 %1338
      %1340 = vrot.lane.b32.xlu0 %v278, 113
      %v1341 = vpop.permute.xlu0 %1340
      %v1342 = vsel %vm730, %v1339, %v1341
      %v1343 = vsel %vm730, %v1341, %v1339
      %v1344 = vmul.f32 %v1342, %v739
      %v1345 = vmul.f32 %v1343, %v743
      %s1346 = scalar_lea.vmem %s3, 24
      %v1347 = vld [vmem:[%s1346] sm:$0xf]
      %v1348 = vpack.c.bf16 %v1344, %v1344
      %v1349 = vpack.c.bf16 %v1345, %v1345
      %v1351 = vsel %vm331, %v1347, 0
      %v1354 = vsel %vm335, %v1348, 0
      %v1357 = vsel %vm335, %v1349, 0
      %1359 = vmatprep.subr.bf16.mxu0 %v1357
      %1360 = vmatpush1.bf16.msra.mxu0 %v1354
      %1361 = vmatprep.subr.bf16.mxu0 0
      %1362 = vmatpush1.bf16.msra.mxu0 0
      %1363 = vmatprep.subr.bf16.mxu0 0
      %1364 = vmatpush1.bf16.msra.mxu0 0
      %1365 = vmatprep.subr.bf16.mxu0 0
      %1366 = vmatpush1.bf16.msra.mxu0 0
      %1367 = vmatprep.subr.bf16.mxu0 0
      %1368 = vmatpush1.bf16.msra.mxu0 0
      %1369 = vmatprep.subr.bf16.mxu0 0
      %1370 = vmatpush1.bf16.msra.mxu0 0
      %1371 = vmatprep.subr.bf16.mxu0 0
      %1372 = vmatpush1.bf16.msra.mxu0 0
      %1373 = vmatprep.subr.bf16.mxu0 0
      %1374 = vmatpush1.bf16.msra.mxu0 0
      %1375 = vmatprep.subr.bf16.mxu0 0
      %1376 = vmatpush1.bf16.msra.mxu0 0
      %1377 = vmatprep.subr.bf16.mxu0 0
      %1378 = vmatpush1.bf16.msra.mxu0 0
      %1379 = vmatprep.subr.bf16.mxu0 0
      %1380 = vmatpush1.bf16.msra.mxu0 0
      %1381 = vmatprep.subr.bf16.mxu0 0
      %1382 = vmatpush1.bf16.msra.mxu0 0
      %1383 = vmatprep.subr.bf16.mxu0 0
      %1384 = vmatpush1.bf16.msra.mxu0 0
      %1385 = vmatprep.subr.bf16.mxu0 0
      %1386 = vmatpush1.bf16.msra.mxu0 0
      %1387 = vmatprep.subr.bf16.mxu0 0
      %1388 = vmatpush1.bf16.msra.mxu0 0
      %1389 = vmatprep.subr.bf16.mxu0 0
      %1390 = vmatpush1.bf16.msra.mxu0 0
      %1391 = vmatprep.mubr.bf16.mxu0 0
      %1392 = vmatmul.mubr.bf16.gmra.mrb[0].mxu0 %v1351
      %v1393 = vpop.f32.mrb[0].mxu0
      %v1394 = vadd.f32 0.0, %v1393
      %v1395 = vpop.f32.mrb[0].mxu0
      %v1396 = vadd.f32 0.0, %v1395
      %v1397 = vpop.f32.mrb[0].mxu0
      %v1398 = vpop.f32.mrb[0].mxu0
      %1399 = vdwg.mxu0
      %v1400 = vadd.f32 %v1336, %v1394
      %v1401 = vadd.f32 %v1337, %v1396
      %1402 = vrot.lane.b32.xlu0 %v277, 112
      %v1403 = vpop.permute.xlu0 %1402
      %1404 = vrot.lane.b32.xlu0 %v278, 112
      %v1405 = vpop.permute.xlu0 %1404
      %v1406 = vsel %vm808, %v1403, %v1405
      %v1407 = vsel %vm808, %v1405, %v1403
      %v1408 = vmul.f32 %v1406, %v817
      %v1409 = vmul.f32 %v1407, %v821
      %s1410 = scalar_lea.vmem %s3, 28
      %v1411 = vld [vmem:[%s1410] sm:$0xf]
      %v1412 = vpack.c.bf16 %v1408, %v1408
      %v1413 = vpack.c.bf16 %v1409, %v1409
      %v1415 = vsel %vm331, %v1411, 0
      %v1418 = vsel %vm335, %v1412, 0
      %v1421 = vsel %vm335, %v1413, 0
      %1423 = vmatprep.subr.bf16.mxu0 %v1421
      %1424 = vmatpush1.bf16.msra.mxu0 %v1418
      %1425 = vmatprep.subr.bf16.mxu0 0
      %1426 = vmatpush1.bf16.msra.mxu0 0
      %1427 = vmatprep.subr.bf16.mxu0 0
      %1428 = vmatpush1.bf16.msra.mxu0 0
      %1429 = vmatprep.subr.bf16.mxu0 0
      %1430 = vmatpush1.bf16.msra.mxu0 0
      %1431 = vmatprep.subr.bf16.mxu0 0
      %1432 = vmatpush1.bf16.msra.mxu0 0
      %1433 = vmatprep.subr.bf16.mxu0 0
      %1434 = vmatpush1.bf16.msra.mxu0 0
      %1435 = vmatprep.subr.bf16.mxu0 0
      %1436 = vmatpush1.bf16.msra.mxu0 0
      %1437 = vmatprep.subr.bf16.mxu0 0
      %1438 = vmatpush1.bf16.msra.mxu0 0
      %1439 = vmatprep.subr.bf16.mxu0 0
      %1440 = vmatpush1.bf16.msra.mxu0 0
      %1441 = vmatprep.subr.bf16.mxu0 0
      %1442 = vmatpush1.bf16.msra.mxu0 0
      %1443 = vmatprep.subr.bf16.mxu0 0
      %1444 = vmatpush1.bf16.msra.mxu0 0
      %1445 = vmatprep.subr.bf16.mxu0 0
      %1446 = vmatpush1.bf16.msra.mxu0 0
      %1447 = vmatprep.subr.bf16.mxu0 0
      %1448 = vmatpush1.bf16.msra.mxu0 0
      %1449 = vmatprep.subr.bf16.mxu0 0
      %1450 = vmatpush1.bf16.msra.mxu0 0
      %1451 = vmatprep.subr.bf16.mxu0 0
      %1452 = vmatpush1.bf16.msra.mxu0 0
      %1453 = vmatprep.subr.bf16.mxu0 0
      %1454 = vmatpush1.bf16.msra.mxu0 0
      %1455 = vmatprep.mubr.bf16.mxu0 0
      %1456 = vmatmul.mubr.bf16.gmra.mrb[0].mxu0 %v1415
      %v1457 = vpop.f32.mrb[0].mxu0
      %v1458 = vadd.f32 0.0, %v1457
      %v1459 = vpop.f32.mrb[0].mxu0
      %v1460 = vadd.f32 0.0, %v1459
      %v1461 = vpop.f32.mrb[0].mxu0
      %v1462 = vpop.f32.mrb[0].mxu0
      %1463 = vdwg.mxu0
      %v1464 = vadd.f32 %v1400, %v1458
      %v1465 = vadd.f32 %v1401, %v1460
      %1466 = vrot.lane.b32.xlu0 %v277, 111
      %v1467 = vpop.permute.xlu0 %1466
      %1468 = vrot.lane.b32.xlu0 %v278, 111
      %v1469 = vpop.permute.xlu0 %1468
      %v1470 = vsel %vm886, %v1467, %v1469
      %v1471 = vsel %vm886, %v1469, %v1467
      %v1472 = vmul.f32 %v1470, %v895
      %v1473 = vmul.f32 %v1471, %v899
      %s1474 = scalar_lea.vmem %s3, 32
      %v1475 = vld [vmem:[%s1474] sm:$0xf]
      %v1476 = vpack.c.bf16 %v1472, %v1472
      %v1477 = vpack.c.bf16 %v1473, %v1473
      %v1479 = vsel %vm331, %v1475, 0
      %v1482 = vsel %vm335, %v1476, 0
      %v1485 = vsel %vm335, %v1477, 0
      %1487 = vmatprep.subr.bf16.mxu0 %v1485
      %1488 = vmatpush1.bf16.msra.mxu0 %v1482
      %1489 = vmatprep.subr.bf16.mxu0 0
      %1490 = vmatpush1.bf16.msra.mxu0 0
      %1491 = vmatprep.subr.bf16.mxu0 0
      %1492 = vmatpush1.bf16.msra.mxu0 0
      %1493 = vmatprep.subr.bf16.mxu0 0
      %1494 = vmatpush1.bf16.msra.mxu0 0
      %1495 = vmatprep.subr.bf16.mxu0 0
      %1496 = vmatpush1.bf16.msra.mxu0 0
      %1497 = vmatprep.subr.bf16.mxu0 0
      %1498 = vmatpush1.bf16.msra.mxu0 0
      %1499 = vmatprep.subr.bf16.mxu0 0
      %1500 = vmatpush1.bf16.msra.mxu0 0
      %1501 = vmatprep.subr.bf16.mxu0 0
      %1502 = vmatpush1.bf16.msra.mxu0 0
      %1503 = vmatprep.subr.bf16.mxu0 0
      %1504 = vmatpush1.bf16.msra.mxu0 0
      %1505 = vmatprep.subr.bf16.mxu0 0
      %1506 = vmatpush1.bf16.msra.mxu0 0
      %1507 = vmatprep.subr.bf16.mxu0 0
      %1508 = vmatpush1.bf16.msra.mxu0 0
      %1509 = vmatprep.subr.bf16.mxu0 0
      %1510 = vmatpush1.bf16.msra.mxu0 0
      %1511 = vmatprep.subr.bf16.mxu0 0
      %1512 = vmatpush1.bf16.msra.mxu0 0
      %1513 = vmatprep.subr.bf16.mxu0 0
      %1514 = vmatpush1.bf16.msra.mxu0 0
      %1515 = vmatprep.subr.bf16.mxu0 0
      %1516 = vmatpush1.bf16.msra.mxu0 0
      %1517 = vmatprep.subr.bf16.mxu0 0
      %1518 = vmatpush1.bf16.msra.mxu0 0
      %1519 = vmatprep.mubr.bf16.mxu0 0
      %1520 = vmatmul.mubr.bf16.gmra.mrb[0].mxu0 %v1479
      %v1521 = vpop.f32.mrb[0].mxu0
      %v1522 = vadd.f32 0.0, %v1521
      %v1523 = vpop.f32.mrb[0].mxu0
      %v1524 = vadd.f32 0.0, %v1523
      %v1525 = vpop.f32.mrb[0].mxu0
      %v1526 = vpop.f32.mrb[0].mxu0
      %1527 = vdwg.mxu0
      %v1528 = vadd.f32 %v1464, %v1522
      %v1529 = vadd.f32 %v1465, %v1524
      %v1530 = vadd.f32 %v1528, %v1529
      %1531 = vadd.xlane.f32.xlu0 %v1530
      %v1532 = vpop.xlane.xlu0 %1531
      %v1533 = vrcp.pop 256.0
      %v1534 = vmul.f32 %v1532, %v1533
      %v1535 = vsub.f32 %v1528, %v1534
      %v1536 = vsub.f32 %v1529, %v1534
      %v1537 = vmul.f32 %v1535, %v1535
      %v1538 = vmul.f32 %v1536, %v1536
      %v1539 = vadd.f32 %v1537, %v1538
      %1540 = vadd.xlane.f32.xlu0 %v1539
      %v1541 = vpop.xlane.xlu0 %1540
      %v1542 = vmul.f32 %v1541, %v1533
      %v1543 = vadd.f32 %v1542, 1e-05
      %v1544 = vrsqrt.pop %v1543
      %v1545 = vmul.f32 %v1535, %v1544
      %v1546 = vmul.f32 %v1536, %v1544
      %v1547 = vmul.f32 %v1545, 0.01
      %v1548 = vmul.f32 %v1546, 0.01
      %v1549 = vmax.f32 %v1545, %v1547
      %v1550 = vmax.f32 %v1546, %v1548
      %1551 = vrot.lane.b32.xlu0 %v1549, 17
      %v1552 = vpop.permute.xlu0 %1551
      %1553 = vrot.lane.b32.xlu0 %v1550, 17
      %v1554 = vpop.permute.xlu0 %1553
      %v1555 = vsel %vm285, %v1552, %v1554
      %v1556 = vsel %vm285, %v1554, %v1552
      %v1557 = vmul.f32 %v1556, %v293
      %v1558 = vmul.f32 %v1555, %v297
      %v1559 = vld [vmem:[%s4] sm:$0xf]
      %v1560 = vpack.c.bf16 %v1557, %v1557
      %v1561 = vpack.c.bf16 %v1558, %v1558
      %1562 = vrot.lane.b32.xlu0 %v1549, 16
      %v1563 = vpop.permute.xlu0 %1562
      %1564 = vrot.lane.b32.xlu0 %v1550, 16
      %v1565 = vpop.permute.xlu0 %1564
      %v1566 = vsel %vm309, %v1563, %v1565
      %v1567 = vsel %vm309, %v1565, %v1563
      %v1568 = vmul.f32 %v1567, %v318
      %v1569 = vmul.f32 %v1566, %v322
      %s1570 = scalar_lea.vmem %s4, 4
      %v1571 = vld [vmem:[%s1570] sm:$0xf]
      %v1572 = vpack.c.bf16 %v1568, %v1568
      %v1573 = vpack.c.bf16 %v1569, %v1569
      %v1575 = vsel %vm331, %v1571, 0
      %v1578 = vsel %vm335, %v1572, 0
      %v1581 = vsel %vm335, %v1573, 0
      %1583 = vmatprep.subr.bf16.mxu0 %v1581
      %1584 = vmatpush1.bf16.msra.mxu0 %v1578
      %1585 = vmatprep.subr.bf16.mxu0 0
      %1586 = vmatpush1.bf16.msra.mxu0 0
      %1587 = vmatprep.subr.bf16.mxu0 0
      %1588 = vmatpush1.bf16.msra.mxu0 0
      %1589 = vmatprep.subr.bf16.mxu0 0
      %1590 = vmatpush1.bf16.msra.mxu0 0
      %1591 = vmatprep.subr.bf16.mxu0 0
      %1592 = vmatpush1.bf16.msra.mxu0 0
      %1593 = vmatprep.subr.bf16.mxu0 0
      %1594 = vmatpush1.bf16.msra.mxu0 0
      %1595 = vmatprep.subr.bf16.mxu0 0
      %1596 = vmatpush1.bf16.msra.mxu0 0
      %1597 = vmatprep.subr.bf16.mxu0 0
      %1598 = vmatpush1.bf16.msra.mxu0 0
      %1599 = vmatprep.subr.bf16.mxu0 0
      %1600 = vmatpush1.bf16.msra.mxu0 0
      %1601 = vmatprep.subr.bf16.mxu0 0
      %1602 = vmatpush1.bf16.msra.mxu0 0
      %1603 = vmatprep.subr.bf16.mxu0 0
      %1604 = vmatpush1.bf16.msra.mxu0 0
      %1605 = vmatprep.subr.bf16.mxu0 0
      %1606 = vmatpush1.bf16.msra.mxu0 0
      %1607 = vmatprep.subr.bf16.mxu0 0
      %1608 = vmatpush1.bf16.msra.mxu0 0
      %1609 = vmatprep.subr.bf16.mxu0 0
      %1610 = vmatpush1.bf16.msra.mxu0 0
      %1611 = vmatprep.subr.bf16.mxu0 0
      %1612 = vmatpush1.bf16.msra.mxu0 0
      %1613 = vmatprep.subr.bf16.mxu0 0
      %1614 = vmatpush1.bf16.msra.mxu0 0
      %1615 = vmatprep.mubr.bf16.mxu0 0
      %1616 = vmatmul.mubr.bf16.gmra.mrb[0].mxu0 %v1575
      %v1617 = vpop.f32.mrb[0].mxu0
      %v1618 = vadd.f32 0.0, %v1617
      %v1619 = vpop.f32.mrb[0].mxu0
      %v1620 = vadd.f32 0.0, %v1619
      %v1621 = vpop.f32.mrb[0].mxu0
      %v1622 = vpop.f32.mrb[0].mxu0
      %1623 = vdwg.mxu0
      %v1625 = vsel %vm331, %v1559, 0
      %v1628 = vsel %vm335, %v1560, 0
      %v1631 = vsel %vm335, %v1561, 0
      %1633 = vmatprep.subr.bf16.mxu0 %v1631
      %1634 = vmatpush1.bf16.msra.mxu0 %v1628
      %1635 = vmatprep.subr.bf16.mxu0 0
      %1636 = vmatpush1.bf16.msra.mxu0 0
      %1637 = vmatprep.subr.bf16.mxu0 0
      %1638 = vmatpush1.bf16.msra.mxu0 0
      %1639 = vmatprep.subr.bf16.mxu0 0
      %1640 = vmatpush1.bf16.msra.mxu0 0
      %1641 = vmatprep.subr.bf16.mxu0 0
      %1642 = vmatpush1.bf16.msra.mxu0 0
      %1643 = vmatprep.subr.bf16.mxu0 0
      %1644 = vmatpush1.bf16.msra.mxu0 0
      %1645 = vmatprep.subr.bf16.mxu0 0
      %1646 = vmatpush1.bf16.msra.mxu0 0
      %1647 = vmatprep.subr.bf16.mxu0 0
      %1648 = vmatpush1.bf16.msra.mxu0 0
      %1649 = vmatprep.subr.bf16.mxu0 0
      %1650 = vmatpush1.bf16.msra.mxu0 0
      %1651 = vmatprep.subr.bf16.mxu0 0
      %1652 = vmatpush1.bf16.msra.mxu0 0
      %1653 = vmatprep.subr.bf16.mxu0 0
      %1654 = vmatpush1.bf16.msra.mxu0 0
      %1655 = vmatprep.subr.bf16.mxu0 0
      %1656 = vmatpush1.bf16.msra.mxu0 0
      %1657 = vmatprep.subr.bf16.mxu0 0
      %1658 = vmatpush1.bf16.msra.mxu0 0
      %1659 = vmatprep.subr.bf16.mxu0 0
      %1660 = vmatpush1.bf16.msra.mxu0 0
      %1661 = vmatprep.subr.bf16.mxu0 0
      %1662 = vmatpush1.bf16.msra.mxu0 0
      %1663 = vmatprep.subr.bf16.mxu0 0
      %1664 = vmatpush1.bf16.msra.mxu0 0
      %1665 = vmatprep.mubr.bf16.mxu0 0
      %1666 = vmatmul.mubr.bf16.gmra.mrb[0].mxu0 %v1625
      %v1667 = vpop.f32.mrb[0].mxu0
      %v1668 = vadd.f32 %v1618, %v1667
      %v1669 = vpop.f32.mrb[0].mxu0
      %v1670 = vadd.f32 %v1620, %v1669
      %v1671 = vpop.f32.mrb[0].mxu0
      %v1672 = vpop.f32.mrb[0].mxu0
      %1673 = vdwg.mxu0
      %1674 = vrot.lane.b32.xlu0 %v1549, 15
      %v1675 = vpop.permute.xlu0 %1674
      %1676 = vrot.lane.b32.xlu0 %v1550, 15
      %v1677 = vpop.permute.xlu0 %1676
      %v1678 = vsel %vm437, %v1675, %v1677
      %v1679 = vsel %vm437, %v1677, %v1675
      %v1680 = vmul.f32 %v1679, %v446
      %v1681 = vmul.f32 %v1678, %v450
      %s1682 = scalar_lea.vmem %s4, 8
      %v1683 = vld [vmem:[%s1682] sm:$0xf]
      %v1684 = vpack.c.bf16 %v1680, %v1680
      %v1685 = vpack.c.bf16 %v1681, %v1681
      %v1687 = vsel %vm331, %v1683, 0
      %v1690 = vsel %vm335, %v1684, 0
      %v1693 = vsel %vm335, %v1685, 0
      %1695 = vmatprep.subr.bf16.mxu0 %v1693
      %1696 = vmatpush1.bf16.msra.mxu0 %v1690
      %1697 = vmatprep.subr.bf16.mxu0 0
      %1698 = vmatpush1.bf16.msra.mxu0 0
      %1699 = vmatprep.subr.bf16.mxu0 0
      %1700 = vmatpush1.bf16.msra.mxu0 0
      %1701 = vmatprep.subr.bf16.mxu0 0
      %1702 = vmatpush1.bf16.msra.mxu0 0
      %1703 = vmatprep.subr.bf16.mxu0 0
      %1704 = vmatpush1.bf16.msra.mxu0 0
      %1705 = vmatprep.subr.bf16.mxu0 0
      %1706 = vmatpush1.bf16.msra.mxu0 0
      %1707 = vmatprep.subr.bf16.mxu0 0
      %1708 = vmatpush1.bf16.msra.mxu0 0
      %1709 = vmatprep.subr.bf16.mxu0 0
      %1710 = vmatpush1.bf16.msra.mxu0 0
      %1711 = vmatprep.subr.bf16.mxu0 0
      %1712 = vmatpush1.bf16.msra.mxu0 0
      %1713 = vmatprep.subr.bf16.mxu0 0
      %1714 = vmatpush1.bf16.msra.mxu0 0
      %1715 = vmatprep.subr.bf16.mxu0 0
      %1716 = vmatpush1.bf16.msra.mxu0 0
      %1717 = vmatprep.subr.bf16.mxu0 0
      %1718 = vmatpush1.bf16.msra.mxu0 0
      %1719 = vmatprep.subr.bf16.mxu0 0
      %1720 = vmatpush1.bf16.msra.mxu0 0
      %1721 = vmatprep.subr.bf16.mxu0 0
      %1722 = vmatpush1.bf16.msra.mxu0 0
      %1723 = vmatprep.subr.bf16.mxu0 0
      %1724 = vmatpush1.bf16.msra.mxu0 0
      %1725 = vmatprep.subr.bf16.mxu0 0
      %1726 = vmatpush1.bf16.msra.mxu0 0
      %1727 = vmatprep.mubr.bf16.mxu0 0
      %1728 = vmatmul.mubr.bf16.gmra.mrb[0].mxu0 %v1687
      %v1729 = vpop.f32.mrb[0].mxu0
      %v1730 = vadd.f32 0.0, %v1729
      %v1731 = vpop.f32.mrb[0].mxu0
      %v1732 = vadd.f32 0.0, %v1731
      %v1733 = vpop.f32.mrb[0].mxu0
      %v1734 = vpop.f32.mrb[0].mxu0
      %1735 = vdwg.mxu0
      %v1736 = vadd.f32 %v1668, %v1730
      %v1737 = vadd.f32 %v1670, %v1732
      %1738 = vrot.lane.b32.xlu0 %v1549, 1
      %v1739 = vpop.permute.xlu0 %1738
      %1740 = vrot.lane.b32.xlu0 %v1550, 1
      %v1741 = vpop.permute.xlu0 %1740
      %v1742 = vsel %vm515, %v1739, %v1741
      %v1743 = vsel %vm515, %v1741, %v1739
      %v1744 = vmul.f32 %v1743, %v524
      %v1745 = vmul.f32 %v1742, %v528
      %s1746 = scalar_lea.vmem %s4, 12
      %v1747 = vld [vmem:[%s1746] sm:$0xf]
      %v1748 = vpack.c.bf16 %v1744, %v1744
      %v1749 = vpack.c.bf16 %v1745, %v1745
      %v1751 = vsel %vm331, %v1747, 0
      %v1754 = vsel %vm335, %v1748, 0
      %v1757 = vsel %vm335, %v1749, 0
      %1759 = vmatprep.subr.bf16.mxu0 %v1757
      %1760 = vmatpush1.bf16.msra.mxu0 %v1754
      %1761 = vmatprep.subr.bf16.mxu0 0
      %1762 = vmatpush1.bf16.msra.mxu0 0
      %1763 = vmatprep.subr.bf16.mxu0 0
      %1764 = vmatpush1.bf16.msra.mxu0 0
      %1765 = vmatprep.subr.bf16.mxu0 0
      %1766 = vmatpush1.bf16.msra.mxu0 0
      %1767 = vmatprep.subr.bf16.mxu0 0
      %1768 = vmatpush1.bf16.msra.mxu0 0
      %1769 = vmatprep.subr.bf16.mxu0 0
      %1770 = vmatpush1.bf16.msra.mxu0 0
      %1771 = vmatprep.subr.bf16.mxu0 0
      %1772 = vmatpush1.bf16.msra.mxu0 0
      %1773 = vmatprep.subr.bf16.mxu0 0
      %1774 = vmatpush1.bf16.msra.mxu0 0
      %1775 = vmatprep.subr.bf16.mxu0 0
      %1776 = vmatpush1.bf16.msra.mxu0 0
      %1777 = vmatprep.subr.bf16.mxu0 0
      %1778 = vmatpush1.bf16.msra.mxu0 0
      %1779 = vmatprep.subr.bf16.mxu0 0
      %1780 = vmatpush1.bf16.msra.mxu0 0
      %1781 = vmatprep.subr.bf16.mxu0 0
      %1782 = vmatpush1.bf16.msra.mxu0 0
      %1783 = vmatprep.subr.bf16.mxu0 0
      %1784 = vmatpush1.bf16.msra.mxu0 0
      %1785 = vmatprep.subr.bf16.mxu0 0
      %1786 = vmatpush1.bf16.msra.mxu0 0
      %1787 = vmatprep.subr.bf16.mxu0 0
      %1788 = vmatpush1.bf16.msra.mxu0 0
      %1789 = vmatprep.subr.bf16.mxu0 0
      %1790 = vmatpush1.bf16.msra.mxu0 0
      %1791 = vmatprep.mubr.bf16.mxu0 0
      %1792 = vmatmul.mubr.bf16.gmra.mrb[0].mxu0 %v1751
      %v1793 = vpop.f32.mrb[0].mxu0
      %v1794 = vadd.f32 0.0, %v1793
      %v1795 = vpop.f32.mrb[0].mxu0
      %v1796 = vadd.f32 0.0, %v1795
      %v1797 = vpop.f32.mrb[0].mxu0
      %v1798 = vpop.f32.mrb[0].mxu0
      %1799 = vdwg.mxu0
      %v1800 = vadd.f32 %v1736, %v1794
      %v1801 = vadd.f32 %v1737, %v1796
      %s1802 = scalar_lea.vmem %s4, 16
      %v1803 = vld [vmem:[%s1802] sm:$0xf]
      %v1804 = vpack.c.bf16 %v1549, %v1549
      %v1805 = vpack.c.bf16 %v1550, %v1550
      %v1807 = vsel %vm331, %v1803, 0
      %v1810 = vsel %vm335, %v1804, 0
      %v1813 = vsel %vm335, %v1805, 0
      %1815 = vmatprep.subr.bf16.mxu0 %v1813
      %1816 = vmatpush1.bf16.msra.mxu0 %v1810
      %1817 = vmatprep.subr.bf16.mxu0 0
      %1818 = vmatpush1.bf16.msra.mxu0 0
      %1819 = vmatprep.subr.bf16.mxu0 0
      %1820 = vmatpush1.bf16.msra.mxu0 0
      %1821 = vmatprep.subr.bf16.mxu0 0
      %1822 = vmatpush1.bf16.msra.mxu0 0
      %1823 = vmatprep.subr.bf16.mxu0 0
      %1824 = vmatpush1.bf16.msra.mxu0 0
      %1825 = vmatprep.subr.bf16.mxu0 0
      %1826 = vmatpush1.bf16.msra.mxu0 0
      %1827 = vmatprep.subr.bf16.mxu0 0
      %1828 = vmatpush1.bf16.msra.mxu0 0
      %1829 = vmatprep.subr.bf16.mxu0 0
      %1830 = vmatpush1.bf16.msra.mxu0 0
      %1831 = vmatprep.subr.bf16.mxu0 0
      %1832 = vmatpush1.bf16.msra.mxu0 0
      %1833 = vmatprep.subr.bf16.mxu0 0
      %1834 = vmatpush1.bf16.msra.mxu0 0
      %1835 = vmatprep.subr.bf16.mxu0 0
      %1836 = vmatpush1.bf16.msra.mxu0 0
      %1837 = vmatprep.subr.bf16.mxu0 0
      %1838 = vmatpush1.bf16.msra.mxu0 0
      %1839 = vmatprep.subr.bf16.mxu0 0
      %1840 = vmatpush1.bf16.msra.mxu0 0
      %1841 = vmatprep.subr.bf16.mxu0 0
      %1842 = vmatpush1.bf16.msra.mxu0 0
      %1843 = vmatprep.subr.bf16.mxu0 0
      %1844 = vmatpush1.bf16.msra.mxu0 0
      %1845 = vmatprep.subr.bf16.mxu0 0
      %1846 = vmatpush1.bf16.msra.mxu0 0
      %1847 = vmatprep.mubr.bf16.mxu0 0
      %1848 = vmatmul.mubr.bf16.gmra.mrb[0].mxu0 %v1807
      %v1849 = vpop.f32.mrb[0].mxu0
      %v1850 = vadd.f32 0.0, %v1849
      %v1851 = vpop.f32.mrb[0].mxu0
      %v1852 = vadd.f32 0.0, %v1851
      %v1853 = vpop.f32.mrb[0].mxu0
      %v1854 = vpop.f32.mrb[0].mxu0
      %1855 = vdwg.mxu0
      %v1856 = vadd.f32 %v1800, %v1850
      %v1857 = vadd.f32 %v1801, %v1852
      %1858 = vrot.lane.b32.xlu0 %v1549, 127
      %v1859 = vpop.permute.xlu0 %1858
      %1860 = vrot.lane.b32.xlu0 %v1550, 127
      %v1861 = vpop.permute.xlu0 %1860
      %v1862 = vsel %vm652, %v1859, %v1861
      %v1863 = vsel %vm652, %v1861, %v1859
      %v1864 = vmul.f32 %v1862, %v661
      %v1865 = vmul.f32 %v1863, %v665
      %s1866 = scalar_lea.vmem %s4, 20
      %v1867 = vld [vmem:[%s1866] sm:$0xf]
      %v1868 = vpack.c.bf16 %v1864, %v1864
      %v1869 = vpack.c.bf16 %v1865, %v1865
      %v1871 = vsel %vm331, %v1867, 0
      %v1874 = vsel %vm335, %v1868, 0
      %v1877 = vsel %vm335, %v1869, 0
      %1879 = vmatprep.subr.bf16.mxu0 %v1877
      %1880 = vmatpush1.bf16.msra.mxu0 %v1874
      %1881 = vmatprep.subr.bf16.mxu0 0
      %1882 = vmatpush1.bf16.msra.mxu0 0
      %1883 = vmatprep.subr.bf16.mxu0 0
      %1884 = vmatpush1.bf16.msra.mxu0 0
      %1885 = vmatprep.subr.bf16.mxu0 0
      %1886 = vmatpush1.bf16.msra.mxu0 0
      %1887 = vmatprep.subr.bf16.mxu0 0
      %1888 = vmatpush1.bf16.msra.mxu0 0
      %1889 = vmatprep.subr.bf16.mxu0 0
      %1890 = vmatpush1.bf16.msra.mxu0 0
      %1891 = vmatprep.subr.bf16.mxu0 0
      %1892 = vmatpush1.bf16.msra.mxu0 0
      %1893 = vmatprep.subr.bf16.mxu0 0
      %1894 = vmatpush1.bf16.msra.mxu0 0
      %1895 = vmatprep.subr.bf16.mxu0 0
      %1896 = vmatpush1.bf16.msra.mxu0 0
      %1897 = vmatprep.subr.bf16.mxu0 0
      %1898 = vmatpush1.bf16.msra.mxu0 0
      %1899 = vmatprep.subr.bf16.mxu0 0
      %1900 = vmatpush1.bf16.msra.mxu0 0
      %1901 = vmatprep.subr.bf16.mxu0 0
      %1902 = vmatpush1.bf16.msra.mxu0 0
      %1903 = vmatprep.subr.bf16.mxu0 0
      %1904 = vmatpush1.bf16.msra.mxu0 0
      %1905 = vmatprep.subr.bf16.mxu0 0
      %1906 = vmatpush1.bf16.msra.mxu0 0
      %1907 = vmatprep.subr.bf16.mxu0 0
      %1908 = vmatpush1.bf16.msra.mxu0 0
      %1909 = vmatprep.subr.bf16.mxu0 0
      %1910 = vmatpush1.bf16.msra.mxu0 0
      %1911 = vmatprep.mubr.bf16.mxu0 0
      %1912 = vmatmul.mubr.bf16.gmra.mrb[0].mxu0 %v1871
      %v1913 = vpop.f32.mrb[0].mxu0
      %v1914 = vadd.f32 0.0, %v1913
      %v1915 = vpop.f32.mrb[0].mxu0
      %v1916 = vadd.f32 0.0, %v1915
      %v1917 = vpop.f32.mrb[0].mxu0
      %v1918 = vpop.f32.mrb[0].mxu0
      %1919 = vdwg.mxu0
      %v1920 = vadd.f32 %v1856, %v1914
      %v1921 = vadd.f32 %v1857, %v1916
      %1922 = vrot.lane.b32.xlu0 %v1549, 113
      %v1923 = vpop.permute.xlu0 %1922
      %1924 = vrot.lane.b32.xlu0 %v1550, 113
      %v1925 = vpop.permute.xlu0 %1924
      %v1926 = vsel %vm730, %v1923, %v1925
      %v1927 = vsel %vm730, %v1925, %v1923
      %v1928 = vmul.f32 %v1926, %v739
      %v1929 = vmul.f32 %v1927, %v743
      %s1930 = scalar_lea.vmem %s4, 24
      %v1931 = vld [vmem:[%s1930] sm:$0xf]
      %v1932 = vpack.c.bf16 %v1928, %v1928
      %v1933 = vpack.c.bf16 %v1929, %v1929
      %v1935 = vsel %vm331, %v1931, 0
      %v1938 = vsel %vm335, %v1932, 0
      %v1941 = vsel %vm335, %v1933, 0
      %1943 = vmatprep.subr.bf16.mxu0 %v1941
      %1944 = vmatpush1.bf16.msra.mxu0 %v1938
      %1945 = vmatprep.subr.bf16.mxu0 0
      %1946 = vmatpush1.bf16.msra.mxu0 0
      %1947 = vmatprep.subr.bf16.mxu0 0
      %1948 = vmatpush1.bf16.msra.mxu0 0
      %1949 = vmatprep.subr.bf16.mxu0 0
      %1950 = vmatpush1.bf16.msra.mxu0 0
      %1951 = vmatprep.subr.bf16.mxu0 0
      %1952 = vmatpush1.bf16.msra.mxu0 0
      %1953 = vmatprep.subr.bf16.mxu0 0
      %1954 = vmatpush1.bf16.msra.mxu0 0
      %1955 = vmatprep.subr.bf16.mxu0 0
      %1956 = vmatpush1.bf16.msra.mxu0 0
      %1957 = vmatprep.subr.bf16.mxu0 0
      %1958 = vmatpush1.bf16.msra.mxu0 0
      %1959 = vmatprep.subr.bf16.mxu0 0
      %1960 = vmatpush1.bf16.msra.mxu0 0
      %1961 = vmatprep.subr.bf16.mxu0 0
      %1962 = vmatpush1.bf16.msra.mxu0 0
      %1963 = vmatprep.subr.bf16.mxu0 0
      %1964 = vmatpush1.bf16.msra.mxu0 0
      %1965 = vmatprep.subr.bf16.mxu0 0
      %1966 = vmatpush1.bf16.msra.mxu0 0
      %1967 = vmatprep.subr.bf16.mxu0 0
      %1968 = vmatpush1.bf16.msra.mxu0 0
      %1969 = vmatprep.subr.bf16.mxu0 0
      %1970 = vmatpush1.bf16.msra.mxu0 0
      %1971 = vmatprep.subr.bf16.mxu0 0
      %1972 = vmatpush1.bf16.msra.mxu0 0
      %1973 = vmatprep.subr.bf16.mxu0 0
      %1974 = vmatpush1.bf16.msra.mxu0 0
      %1975 = vmatprep.mubr.bf16.mxu0 0
      %1976 = vmatmul.mubr.bf16.gmra.mrb[0].mxu0 %v1935
      %v1977 = vpop.f32.mrb[0].mxu0
      %v1978 = vadd.f32 0.0, %v1977
      %v1979 = vpop.f32.mrb[0].mxu0
      %v1980 = vadd.f32 0.0, %v1979
      %v1981 = vpop.f32.mrb[0].mxu0
      %v1982 = vpop.f32.mrb[0].mxu0
      %1983 = vdwg.mxu0
      %v1984 = vadd.f32 %v1920, %v1978
      %v1985 = vadd.f32 %v1921, %v1980
      %1986 = vrot.lane.b32.xlu0 %v1549, 112
      %v1987 = vpop.permute.xlu0 %1986
      %1988 = vrot.lane.b32.xlu0 %v1550, 112
      %v1989 = vpop.permute.xlu0 %1988
      %v1990 = vsel %vm808, %v1987, %v1989
      %v1991 = vsel %vm808, %v1989, %v1987
      %v1992 = vmul.f32 %v1990, %v817
      %v1993 = vmul.f32 %v1991, %v821
      %s1994 = scalar_lea.vmem %s4, 28
      %v1995 = vld [vmem:[%s1994] sm:$0xf]
      %v1996 = vpack.c.bf16 %v1992, %v1992
      %v1997 = vpack.c.bf16 %v1993, %v1993
      %v1999 = vsel %vm331, %v1995, 0
      %v2002 = vsel %vm335, %v1996, 0
      %v2005 = vsel %vm335, %v1997, 0
      %2007 = vmatprep.subr.bf16.mxu0 %v2005
      %2008 = vmatpush1.bf16.msra.mxu0 %v2002
      %2009 = vmatprep.subr.bf16.mxu0 0
      %2010 = vmatpush1.bf16.msra.mxu0 0
      %2011 = vmatprep.subr.bf16.mxu0 0
      %2012 = vmatpush1.bf16.msra.mxu0 0
      %2013 = vmatprep.subr.bf16.mxu0 0
      %2014 = vmatpush1.bf16.msra.mxu0 0
      %2015 = vmatprep.subr.bf16.mxu0 0
      %2016 = vmatpush1.bf16.msra.mxu0 0
      %2017 = vmatprep.subr.bf16.mxu0 0
      %2018 = vmatpush1.bf16.msra.mxu0 0
      %2019 = vmatprep.subr.bf16.mxu0 0
      %2020 = vmatpush1.bf16.msra.mxu0 0
      %2021 = vmatprep.subr.bf16.mxu0 0
      %2022 = vmatpush1.bf16.msra.mxu0 0
      %2023 = vmatprep.subr.bf16.mxu0 0
      %2024 = vmatpush1.bf16.msra.mxu0 0
      %2025 = vmatprep.subr.bf16.mxu0 0
      %2026 = vmatpush1.bf16.msra.mxu0 0
      %2027 = vmatprep.subr.bf16.mxu0 0
      %2028 = vmatpush1.bf16.msra.mxu0 0
      %2029 = vmatprep.subr.bf16.mxu0 0
      %2030 = vmatpush1.bf16.msra.mxu0 0
      %2031 = vmatprep.subr.bf16.mxu0 0
      %2032 = vmatpush1.bf16.msra.mxu0 0
      %2033 = vmatprep.subr.bf16.mxu0 0
      %2034 = vmatpush1.bf16.msra.mxu0 0
      %2035 = vmatprep.subr.bf16.mxu0 0
      %2036 = vmatpush1.bf16.msra.mxu0 0
      %2037 = vmatprep.subr.bf16.mxu0 0
      %2038 = vmatpush1.bf16.msra.mxu0 0
      %2039 = vmatprep.mubr.bf16.mxu0 0
      %2040 = vmatmul.mubr.bf16.gmra.mrb[0].mxu0 %v1999
      %v2041 = vpop.f32.mrb[0].mxu0
      %v2042 = vadd.f32 0.0, %v2041
      %v2043 = vpop.f32.mrb[0].mxu0
      %v2044 = vadd.f32 0.0, %v2043
      %v2045 = vpop.f32.mrb[0].mxu0
      %v2046 = vpop.f32.mrb[0].mxu0
      %2047 = vdwg.mxu0
      %v2048 = vadd.f32 %v1984, %v2042
      %v2049 = vadd.f32 %v1985, %v2044
      %2050 = vrot.lane.b32.xlu0 %v1549, 111
      %v2051 = vpop.permute.xlu0 %2050
      %2052 = vrot.lane.b32.xlu0 %v1550, 111
      %v2053 = vpop.permute.xlu0 %2052
      %v2054 = vsel %vm886, %v2051, %v2053
      %v2055 = vsel %vm886, %v2053, %v2051
      %v2056 = vmul.f32 %v2054, %v895
      %v2057 = vmul.f32 %v2055, %v899
      %s2058 = scalar_lea.vmem %s4, 32
      %v2059 = vld [vmem:[%s2058] sm:$0xf]
      %v2060 = vpack.c.bf16 %v2056, %v2056
      %v2061 = vpack.c.bf16 %v2057, %v2057
      %v2063 = vsel %vm331, %v2059, 0
      %v2066 = vsel %vm335, %v2060, 0
      %v2069 = vsel %vm335, %v2061, 0
      %2071 = vmatprep.subr.bf16.mxu0 %v2069
      %2072 = vmatpush1.bf16.msra.mxu0 %v2066
      %2073 = vmatprep.subr.bf16.mxu0 0
      %2074 = vmatpush1.bf16.msra.mxu0 0
      %2075 = vmatprep.subr.bf16.mxu0 0
      %2076 = vmatpush1.bf16.msra.mxu0 0
      %2077 = vmatprep.subr.bf16.mxu0 0
      %2078 = vmatpush1.bf16.msra.mxu0 0
      %2079 = vmatprep.subr.bf16.mxu0 0
      %2080 = vmatpush1.bf16.msra.mxu0 0
      %2081 = vmatprep.subr.bf16.mxu0 0
      %2082 = vmatpush1.bf16.msra.mxu0 0
      %2083 = vmatprep.subr.bf16.mxu0 0
      %2084 = vmatpush1.bf16.msra.mxu0 0
      %2085 = vmatprep.subr.bf16.mxu0 0
      %2086 = vmatpush1.bf16.msra.mxu0 0
      %2087 = vmatprep.subr.bf16.mxu0 0
      %2088 = vmatpush1.bf16.msra.mxu0 0
      %2089 = vmatprep.subr.bf16.mxu0 0
      %2090 = vmatpush1.bf16.msra.mxu0 0
      %2091 = vmatprep.subr.bf16.mxu0 0
      %2092 = vmatpush1.bf16.msra.mxu0 0
      %2093 = vmatprep.subr.bf16.mxu0 0
      %2094 = vmatpush1.bf16.msra.mxu0 0
      %2095 = vmatprep.subr.bf16.mxu0 0
      %2096 = vmatpush1.bf16.msra.mxu0 0
      %2097 = vmatprep.subr.bf16.mxu0 0
      %2098 = vmatpush1.bf16.msra.mxu0 0
      %2099 = vmatprep.subr.bf16.mxu0 0
      %2100 = vmatpush1.bf16.msra.mxu0 0
      %2101 = vmatprep.subr.bf16.mxu0 0
      %2102 = vmatpush1.bf16.msra.mxu0 0
      %2103 = vmatprep.mubr.bf16.mxu0 0
      %2104 = vmatmul.mubr.bf16.gmra.mrb[0].mxu0 %v2063
      %v2105 = vpop.f32.mrb[0].mxu0
      %v2106 = vadd.f32 0.0, %v2105
      %v2107 = vpop.f32.mrb[0].mxu0
      %v2108 = vadd.f32 0.0, %v2107
      %v2109 = vpop.f32.mrb[0].mxu0
      %v2110 = vpop.f32.mrb[0].mxu0
      %2111 = vdwg.mxu0
      %v2112 = vadd.f32 %v2048, %v2106
      %v2113 = vadd.f32 %v2049, %v2108
      %v2114 = vadd.f32 %v2112, %v2113
      %2115 = vadd.xlane.f32.xlu0 %v2114
      %v2116 = vpop.xlane.xlu0 %2115
      %v2117 = vmul.f32 %v2116, %v1533
      %v2118 = vsub.f32 %v2112, %v2117
      %v2119 = vsub.f32 %v2113, %v2117
      %v2120 = vmul.f32 %v2118, %v2118
      %v2121 = vmul.f32 %v2119, %v2119
      %v2122 = vadd.f32 %v2120, %v2121
      %2123 = vadd.xlane.f32.xlu0 %v2122
      %v2124 = vpop.xlane.xlu0 %2123
      %v2125 = vmul.f32 %v2124, %v1533
      %v2126 = vadd.f32 %v2125, 1e-05
      %v2127 = vrsqrt.pop %v2126
      %v2128 = vmul.f32 %v2118, %v2127
      %v2129 = vmul.f32 %v2119, %v2127
      %v2130 = vmul.f32 %v2128, 0.01
      %v2131 = vmul.f32 %v2129, 0.01
      %v2132 = vmax.f32 %v2128, %v2130
      %v2133 = vmax.f32 %v2129, %v2131
      %2134 = vst [vmem:[%s271] sm:$0xff] %v2132
      %2135 = vst [vmem:[%s271 + $0x8] sm:$0xff] %v2133
      %p2136 = scmp.lt.s32.totalorder %s17, 1
      %s2137 = scalar_select %p2136, %s17, 1
      %s2138 = smul.addr %s2137, 2
      %s2139 = smul.addr %s2138, 8
      %s2140 = scalar_lea.vmem %s6, %s2139
      // Predicated region
      $region45: #{unest_block_forward.1} parent=43 // pred_check
        %p2141 = pneg %p171
      $region46: #{unest_block_forward.1} parent=43 // pred_check_branch
        %2143 = sbr.rel (%p2141) target = $region48
      $region47: #{unest_block_forward.1} parent=43 // pred_region
        _
      $region48: #{unest_block_forward.1} parent=43 // pred_fallthru
        _
    $region44: #{unest_block_forward.1} parent=5 // pred_fallthru
      _
    %p2144 = scmp.le.s32.totalorder 2, %s12
    // Predicated region
    $region49: #{unest_block_forward.1} parent=5 // pred_check
      %p2145 = pneg %p2144
    $region50: #{unest_block_forward.1} parent=5 // pred_check_branch
      %2147 = sbr.rel (%p2145) target = $region52
    $region51: #{unest_block_forward.1} parent=5 // pred_region
      %s2148 = ssub.s32 %s12, 2
      // Predicated region
      $region53: #{unest_block_forward.1} parent=51 // pred_check
        %p2149 = pneg %p177
      $region54: #{unest_block_forward.1} parent=51 // pred_check_branch
        %2151 = sbr.rel (%p2149) target = $region56
      $region55: #{unest_block_forward.1} parent=51 // pred_region
        %p2152 = scmp.lt.s32.totalorder %s18, 1
        %s2153 = scalar_select %p2152, %s18, 1
        %s2154 = smul.addr %s2153, 2
        %s2155 = smul.addr %s2154, 8
        %s2156 = scalar_lea.vmem %s6, %s2155
      $region56: #{unest_block_forward.1} parent=51 // pred_fallthru
        _
    $region52: #{unest_block_forward.1} parent=5 // pred_fallthru
      _
  $region6: #{unest_block_forward.1} parent=0 // loop_footer
    %s16 = sadd.s32 1, %s12
  $region7: #{unest_block_forward.1} parent=0 // loop_footer_branch
    %11 = sbr.rel target = $region3
  $region8: #{unest_block_forward.1} parent=0 // loop_exit
    _

</llo_original>
